<compile_context>
chip_gen: v6e
topology: v6e:2x2x1
jax: 0.10.0
libtpu: 0.0.40
codegen_flags: <defaults>
</compile_context>

<pallas_src>
import functools

import jax
import jax.numpy as jnp
from jax import lax
from jax.experimental import pallas as pl
from jax.experimental.pallas import tpu as pltpu


def _round_up(x, m):
    return ((x + m - 1) // m) * m


def _vmem_limit(need_bytes):
    """Per-generation VMEM request: ~3/4 of physical capacity as the ceiling
    (64 MiB/TC on v7x, 128 MiB on v5e/v6e), ~2x the static estimate below it."""
    try:
        cap = int(getattr(pltpu.get_tpu_info(), "vmem_capacity_bytes",
                          64 * 2**20))
    except Exception:
        cap = 64 * 2**20
    ceiling = (cap * 3) // 4
    return int(max(8 * 2**20, min(ceiling, 2 * need_bytes + 2 * 2**20)))


# ---------------------------------------------------------------------------
# Tiled matmul (+ optional bias, ReLU epilogue) for the convolutions.
#   A: (M, K) bf16, B: (K, N) bf16 (pre-padded offline), f32 VMEM accumulator.
# ---------------------------------------------------------------------------
def _matmul_kernel(*refs, has_bias, activation):
    if has_bias:
        a_ref, b_ref, bias_ref, o_ref, acc_ref = refs
    else:
        a_ref, b_ref, o_ref, acc_ref = refs
        bias_ref = None

    k = pl.program_id(2)

    @pl.when(k == 0)
    def _init():
        acc_ref[...] = jnp.zeros_like(acc_ref)

    acc_ref[...] += jnp.dot(a_ref[...], b_ref[...],
                            preferred_element_type=jnp.float32)

    @pl.when(k == pl.num_programs(2) - 1)
    def _finalize():
        out = acc_ref[...]
        if bias_ref is not None:
            out = out + bias_ref[...]
        if activation == "relu":
            out = jnp.maximum(out, 0.0)
        o_ref[...] = out.astype(o_ref.dtype)


def matmul_bias(a, b_p, bias_p=None, *, n_out, activation=None,
                out_dtype=jnp.bfloat16,
                tm_target=2048, tn_target=128, tk_target=1024):
    """act(a @ b + bias). b_p/bias_p are pre-padded (offline) bf16/f32."""
    M, K = a.shape
    Kp, Np = b_p.shape
    tk = min(tk_target, Kp)
    tn = min(tn_target, Np)
    assert Kp % tk == 0 and Np % tn == 0, (Kp, tk, Np, tn)
    tm = min(tm_target, _round_up(M, 8))
    Mp = _round_up(M, tm)

    a_p = jnp.pad(a.astype(jnp.bfloat16), ((0, Mp - M), (0, Kp - K)))

    in_specs = [
        pl.BlockSpec((tm, tk), lambda i, j, k: (i, k)),
        pl.BlockSpec((tk, tn), lambda i, j, k: (k, j)),
    ]
    operands = [a_p, b_p]
    has_bias = bias_p is not None
    if has_bias:
        in_specs.append(pl.BlockSpec((1, tn), lambda i, j, k: (0, j)))
        operands.append(bias_p)

    grid = (Mp // tm, Np // tn, Kp // tk)
    out_size = jnp.dtype(out_dtype).itemsize
    need = (2 * 2 * (tm * tk + tk * tn)        # double-buffered bf16 A/B tiles
            + 2 * tm * tn * out_size           # double-buffered output tiles
            + tm * tn * 4                      # f32 accumulator
            + (2 * tn * 4 if has_bias else 0))

    out_p = pl.pallas_call(
        functools.partial(_matmul_kernel, has_bias=has_bias,
                          activation=activation),
        out_shape=jax.ShapeDtypeStruct((Mp, Np), out_dtype),
        grid=grid,
        in_specs=in_specs,
        out_specs=pl.BlockSpec((tm, tn), lambda i, j, k: (i, j)),
        scratch_shapes=[pltpu.VMEM((tm, tn), jnp.float32)],
        compiler_params=pltpu.CompilerParams(
            dimension_semantics=("parallel", "parallel", "arbitrary"),
            vmem_limit_bytes=_vmem_limit(need)),
        cost_estimate=pl.CostEstimate(
            flops=2 * Mp * Np * Kp, transcendentals=0,
            bytes_accessed=2 * Mp * Kp + 2 * Kp * Np + out_size * Mp * Np),
    )(*operands)
    return out_p[:M, :n_out]


# ---------------------------------------------------------------------------
# Training-mode BatchNorm(+ReLU) over (M, C):
#   Stage 1: per-channel sum / sum-of-squares, 2-way parallel over row halves.
#   Stage 2: tiny jnp scale/shift solve, then tiled x*scale+shift -> ReLU.
# ---------------------------------------------------------------------------
def _bn_stats_kernel(x_ref, stats_ref):
    @pl.when(pl.program_id(1) == 0)
    def _init():
        stats_ref[...] = jnp.zeros_like(stats_ref)

    x = x_ref[...].astype(jnp.float32)
    stats_ref[0:1, :] += jnp.sum(x, axis=0, keepdims=True)
    stats_ref[1:2, :] += jnp.sum(x * x, axis=0, keepdims=True)


def _bn_apply_relu_kernel(x_ref, scale_ref, shift_ref, o_ref):
    y = x_ref[...].astype(jnp.float32) * scale_ref[...] + shift_ref[...]
    o_ref[...] = jnp.maximum(y, 0.0).astype(o_ref.dtype)


def bn_relu(x, gamma, beta, eps=1e-5, tm_target=2048, out_dtype=jnp.bfloat16):
    M, C = x.shape
    tm = min(tm_target, _round_up(-(-M // 2), 16))
    Mp = _round_up(M, 2 * tm)
    steps = Mp // (2 * tm)
    x_p = jnp.pad(x.astype(jnp.bfloat16), ((0, Mp - M), (0, 0)))

    need_stats = 2 * tm * C * 2 + 8 * C * 4
    stats = pl.pallas_call(
        _bn_stats_kernel,
        out_shape=jax.ShapeDtypeStruct((16, C), jnp.float32),
        grid=(2, steps),
        in_specs=[pl.BlockSpec((tm, C), lambda p, i: (p * steps + i, 0))],
        out_specs=pl.BlockSpec((8, C), lambda p, i: (p, 0)),
        compiler_params=pltpu.CompilerParams(
            dimension_semantics=("parallel", "arbitrary"),
            vmem_limit_bytes=_vmem_limit(need_stats)),
        cost_estimate=pl.CostEstimate(
            flops=3 * Mp * C, transcendentals=0, bytes_accessed=2 * Mp * C),
    )(x_p)

    s = stats[:8] + stats[8:]                      # combine the two halves
    mean = s[0] / M
    var = jnp.maximum(s[1] / M - mean * mean, 0.0)  # biased var, clamped >= 0
    inv_std = lax.rsqrt(var + eps)
    scale = (gamma * inv_std).reshape(1, C).astype(jnp.float32)
    shift = (beta - mean * gamma * inv_std).reshape(1, C).astype(jnp.float32)

    out_size = jnp.dtype(out_dtype).itemsize
    need_apply = 2 * tm * C * (2 + out_size) + 4 * C * 4
    out_p = pl.pallas_call(
        _bn_apply_relu_kernel,
        out_shape=jax.ShapeDtypeStruct((Mp, C), out_dtype),
        grid=(Mp // tm,),
        in_specs=[
            pl.BlockSpec((tm, C), lambda i: (i, 0)),
            pl.BlockSpec((1, C), lambda i: (0, 0)),
            pl.BlockSpec((1, C), lambda i: (0, 0)),
        ],
        out_specs=pl.BlockSpec((tm, C), lambda i: (i, 0)),
        compiler_params=pltpu.CompilerParams(
            dimension_semantics=("parallel",),
            vmem_limit_bytes=_vmem_limit(need_apply)),
        cost_estimate=pl.CostEstimate(
            flops=3 * Mp * C, transcendentals=0,
            bytes_accessed=(2 + out_size) * Mp * C),
    )(x_p, scale, shift)
    return out_p[:M, :]


# ---------------------------------------------------------------------------
# Final Linear(K, 1) + sigmoid: K-tiled multiply/reduce, no N padding.
#   Outer grid axis splits K 2-way ("parallel") so v7x's two cores both work.
# ---------------------------------------------------------------------------
_LIN_TK_TARGET = 32768
_LIN_KSPLIT = 2


def _linear_k_layout(K, tk_target=_LIN_TK_TARGET, ksplit=_LIN_KSPLIT):
    tk = min(tk_target, _round_up(-(-K // ksplit), 128))
    Kp = _round_up(K, ksplit * tk)
    return tk, Kp, Kp // (ksplit * tk)


def _linear_partial_kernel(a_ref, w_ref, o_ref, acc_ref):
    kk = pl.program_id(1)

    @pl.when(kk == 0)
    def _init():
        acc_ref[...] = jnp.zeros_like(acc_ref)

    a = a_ref[...].astype(jnp.float32)
    w = w_ref[...].astype(jnp.float32)             # (1, tk), broadcast over rows
    acc_ref[...] += jnp.sum(a * w, axis=-1, keepdims=True)

    @pl.when(kk == pl.num_programs(1) - 1)
    def _finalize():
        o_ref[...] = acc_ref[...]


def linear_sigmoid(feat, w_row_p, bias):
    B, K = feat.shape
    tk, Kp, steps = _linear_k_layout(K)
    assert w_row_p.shape == (1, Kp), (w_row_p.shape, Kp)
    Bp = _round_up(B, 8)
    a_p = jnp.pad(feat.astype(jnp.bfloat16), ((0, Bp - B), (0, Kp - K)))

    need = 2 * Bp * tk * 2 + 2 * tk * 2 + 2 * Bp * 128 * 4 + Bp * 128 * 4
    partials = pl.pallas_call(
        _linear_partial_kernel,
        out_shape=jax.ShapeDtypeStruct((_LIN_KSPLIT * Bp, 128), jnp.float32),
        grid=(_LIN_KSPLIT, steps),
        in_specs=[
            pl.BlockSpec((Bp, tk), lambda p, kk: (0, p * steps + kk)),
            pl.BlockSpec((1, tk), lambda p, kk: (0, p * steps + kk)),
        ],
        out_specs=pl.BlockSpec((Bp, 128), lambda p, kk: (p, 0)),
        scratch_shapes=[pltpu.VMEM((Bp, 128), jnp.float32)],
        compiler_params=pltpu.CompilerParams(
            dimension_semantics=("parallel", "arbitrary"),
            vmem_limit_bytes=_vmem_limit(need)),
        cost_estimate=pl.CostEstimate(
            flops=2 * Bp * Kp, transcendentals=0,
            bytes_accessed=2 * Bp * Kp + 2 * Kp + 4 * _LIN_KSPLIT * Bp * 128),
    )(a_p, w_row_p)

    acc = partials.reshape(_LIN_KSPLIT, Bp, 128).sum(axis=0)
    logits = acc[:B, 0:1] + bias.reshape(1, 1)
    return jax.nn.sigmoid(logits.astype(jnp.float32))


# ---------------------------------------------------------------------------
# Conv via im2col (bf16 glue fused into the surrounding jit) + Pallas matmul.
# ---------------------------------------------------------------------------
def im2col(x_nhwc, kh, kw, stride):
    # TODO(synk): fuse the patch gather into the matmul kernel (grid axis over
    # the kh*kw taps + manual/strided DMA from the NHWC map) to avoid
    # materializing this buffer at the full 510x510 problem size.
    N, H, W, C = x_nhwc.shape
    OH = (H - kh) // stride + 1
    OW = (W - kw) // stride + 1
    patches = []
    for i in range(kh):
        for j in range(kw):
            patches.append(
                x_nhwc[:, i:i + stride * OH:stride, j:j + stride * OW:stride, :])
    p = jnp.stack(patches, axis=3)                 # (N, OH, OW, KH*KW, C)
    return p.reshape(N * OH * OW, kh * kw * C), OH, OW


def conv2d_pallas(x_nhwc, w_p, bias_p, *, kh, kw, stride, n_out,
                  activation, out_dtype=jnp.bfloat16):
    cols, OH, OW = im2col(x_nhwc, kh, kw, stride)
    out = matmul_bias(cols, w_p, bias_p, n_out=n_out, activation=activation,
                      out_dtype=out_dtype)
    N = x_nhwc.shape[0]
    return out.reshape(N, OH, OW, n_out)


# ---------------------------------------------------------------------------
# Full Discriminator forward
# ---------------------------------------------------------------------------
@jax.jit
def discriminator_forward(params, x_nchw, y_nchw):
    x = jnp.concatenate([x_nchw, y_nchw], axis=1)            # (N, 6, H, W)
    x = jnp.transpose(x, (0, 2, 3, 1)).astype(jnp.bfloat16)  # NHWC, bf16
    h1 = conv2d_pallas(x, params["w1_p"], params["b1_p"],
                       kh=4, kw=4, stride=2, n_out=64, activation="relu")
    # conv2 bias dropped: per-channel constant cancelled by training-mode BN.
    h2 = conv2d_pallas(h1, params["w2_p"], None,
                       kh=4, kw=4, stride=2, n_out=128, activation=None)
    N, OH, OW, C = h2.shape
    h2 = bn_relu(h2.reshape(N * OH * OW, C), params["gamma"], params["beta"])
    # NHWC flatten (pure reshape); wl_p rows were permuted offline so this
    # matches torch's NCHW view(N, -1).
    feat = h2.reshape(N, OH * OW * C)
    return linear_sigmoid(feat, params["wl_p"], params["bl"])


# ---------------------------------------------------------------------------
# Parameters (torch-layout init + one-time offline packing)
# ---------------------------------------------------------------------------
def init_params(key, in_spatial):
    s1 = (in_spatial - 4) // 2 + 1
    s2 = (s1 - 4) // 2 + 1
    feat = 128 * s2 * s2
    k1, k2, k3, k4, k5, k6 = jax.random.split(key, 6)
    params = {
        "w1": jax.random.normal(k1, (64, 6, 4, 4), jnp.float32) * 0.05,
        "b1": jax.random.normal(k2, (64,), jnp.float32) * 0.05,
        "w2": jax.random.normal(k3, (128, 64, 4, 4), jnp.float32) * 0.02,
        "b2": jax.random.normal(k4, (128,), jnp.float32) * 0.02,
        "gamma": jnp.ones((128,), jnp.float32),
        "beta": jnp.zeros((128,), jnp.float32),
        "wl": jax.random.normal(k5, (feat, 1), jnp.float32) * 0.01,
        "bl": jax.random.normal(k6, (1,), jnp.float32) * 0.01,
    }
    return params, s2


def _pack_conv_weight(w_torch, bias, tk_target=1024, tn_target=128):
    OC, IC, KH, KW = w_torch.shape
    w_mat = jnp.transpose(w_torch, (2, 3, 1, 0)).reshape(KH * KW * IC, OC)
    K, N = w_mat.shape
    tk = min(tk_target, _round_up(K, 128))
    tn = min(tn_target, _round_up(N, 128))
    Kp, Np = _round_up(K, tk), _round_up(N, tn)
    w_p = jnp.pad(w_mat, ((0, Kp - K), (0, Np - N))).astype(jnp.bfloat16)
    bias_p = None
    if bias is not None:
        bias_p = jnp.pad(bias.reshape(1, N).astype(jnp.float32),
                         ((0, 0), (0, Np - N)))
    return w_p, bias_p


def prepare_params(params, out_spatial, channels=128):
    """One-time offline weight plumbing: conv weights transposed/zero-padded/
    bf16, conv1 bias padded f32, BN-cancelled conv2 bias dropped, Linear rows
    permuted NCHW->NHWC and packed as a single bf16 row (no N padding)."""
    w1_p, b1_p = _pack_conv_weight(params["w1"], params["b1"])
    w2_p, _ = _pack_conv_weight(params["w2"], None)

    wl = params["wl"]                               # (K, 1), NCHW-flatten rows
    o = wl.shape[1]
    wl_nhwc = (wl.reshape(channels, out_spatial, out_spatial, o)
                 .transpose(1, 2, 0, 3)
                 .reshape(out_spatial * out_spatial * channels, o))
    K = wl_nhwc.shape[0]
    _, Kp, _ = _linear_k_layout(K)
    wl_row = jnp.pad(wl_nhwc.reshape(1, K),
                     ((0, 0), (0, Kp - K))).astype(jnp.bfloat16)

    return {
        "w1_p": w1_p, "b1_p": b1_p, "w2_p": w2_p,
        "gamma": params["gamma"].astype(jnp.float32),
        "beta": params["beta"].astype(jnp.float32),
        "wl_p": wl_row, "bl": params["bl"].astype(jnp.float32),
    }


# Pure-JAX f32 reference (same semantics as the torch module), for checking.
def reference_forward(raw, x_nchw, y_nchw, eps=1e-5):
    x = jnp.concatenate([x_nchw, y_nchw], axis=1)
    dn = ("NCHW", "OIHW", "NCHW")
    h = lax.conv_general_dilated(x, raw["w1"], (2, 2), "VALID",
                                 dimension_numbers=dn)
    h = jax.nn.relu(h + raw["b1"].reshape(1, -1, 1, 1))
    h = lax.conv_general_dilated(h, raw["w2"], (2, 2), "VALID",
                                 dimension_numbers=dn)
    h = h + raw["b2"].reshape(1, -1, 1, 1)
    mean = h.mean(axis=(0, 2, 3), keepdims=True)
    var = h.var(axis=(0, 2, 3), keepdims=True)
    h = (h - mean) * lax.rsqrt(var + eps)
    h = h * raw["gamma"].reshape(1, -1, 1, 1) + raw["beta"].reshape(1, -1, 1, 1)
    h = jax.nn.relu(h)
    feat = h.reshape(h.shape[0], -1)
    return jax.nn.sigmoid(feat @ raw["wl"] + raw["bl"])


if __name__ == "__main__":
    key = jax.random.PRNGKey(0)
    kp, kx, ky = jax.random.split(key, 3)

    BATCH, CHS, SPATIAL = 2, 3, 22   # 22 -> conv1 10x10 -> conv2 4x4
    raw_params, out_spatial = init_params(kp, SPATIAL)
    params = prepare_params(raw_params, out_spatial)

    x = jax.random.normal(kx, (BATCH, CHS, SPATIAL, SPATIAL), jnp.float32)
    y = jax.random.normal(ky, (BATCH, CHS, SPATIAL, SPATIAL), jnp.float32)

    out = discriminator_forward(params, x, y)
    out = jax.block_until_ready(out)

    assert out.shape == (BATCH, 1)
    assert bool(jnp.all(jnp.isfinite(out)))
    assert bool(jnp.all((out >= 0.0) & (out <= 1.0)))

    ref = reference_forward(raw_params, x, y)
    assert bool(jnp.max(jnp.abs(out - ref)) < 5e-2), (out, ref)
    print("KERNEL_OK")
</pallas_src>

<mosaic_0001>
module attributes {stable_mosaic.version = 11 : i64} {
  func.func @_matmul_kernel(%arg0: i32, %arg1: i32, %arg2: i32, %arg3: memref<200x128xbf16, #tpu.memory_space<vmem>>, %arg4: memref<128x128xbf16, #tpu.memory_space<vmem>>, %arg5: memref<1x128xf32, #tpu.memory_space<vmem>>, %arg6: memref<200x128xbf16, #tpu.memory_space<vmem>>, %arg7: memref<200x128xf32, #tpu.memory_space<vmem>>) attributes {dimension_semantics = [#tpu.dimension_semantics<parallel>, #tpu.dimension_semantics<parallel>, #tpu.dimension_semantics<arbitrary>], iteration_bounds = array<i64: 1, 1, 1>, scalar_prefetch = 0 : i64, scratch_operands = 1 : i64, tpu.core_type = #tpu.core_type<tc>, window_params = [{transform_indices = @transform_0, window_bounds = array<i64: 200, 128>}, {transform_indices = @transform_1, window_bounds = array<i64: 128, 128>}, {transform_indices = @transform_2, window_bounds = array<i64: 1, 128>}, {transform_indices = @transform_3, window_bounds = array<i64: 200, 128>}]} {
    %c0_i32 = arith.constant 0 : i32
    %0 = arith.cmpi eq, %arg2, %c0_i32 : i32
    %1 = arith.extui %0 : i1 to i32
    %c0_i32_0 = arith.constant 0 : i32
    %2 = arith.cmpi ne, %1, %c0_i32_0 : i32
    scf.if %2 {
      %cst_10 = arith.constant 0.000000e+00 : f32
      %12 = vector.broadcast %cst_10 : f32 to vector<200x128xf32>
      %c0_11 = arith.constant 0 : index
      %c0_12 = arith.constant 0 : index
      %13 = vector.load %arg7[%c0_11, %c0_12] : memref<200x128xf32, #tpu.memory_space<vmem>>, vector<200x128xf32>
      tpu.vector_store %arg7[%c0_11, %c0_12], %12 {strides = array<i32>} : memref<200x128xf32, #tpu.memory_space<vmem>>, vector<200x128xf32>,
    } else {
    }
    %c0 = arith.constant 0 : index
    %c0_1 = arith.constant 0 : index
    %3 = vector.load %arg7[%c0, %c0_1] : memref<200x128xf32, #tpu.memory_space<vmem>>, vector<200x128xf32>
    %c0_2 = arith.constant 0 : index
    %c0_3 = arith.constant 0 : index
    %4 = vector.load %arg3[%c0_2, %c0_3] : memref<200x128xbf16, #tpu.memory_space<vmem>>, vector<200x128xbf16>
    %c0_4 = arith.constant 0 : index
    %c0_5 = arith.constant 0 : index
    %5 = vector.load %arg4[%c0_4, %c0_5] : memref<128x128xbf16, #tpu.memory_space<vmem>>, vector<128x128xbf16>
    %cst = arith.constant dense<0.000000e+00> : vector<200x128xf32>
    %6 = tpu.matmul %4, %5, %cst {dimension_numbers = #tpu.dot_dimension_numbers<[1], [0], [0], [1], [0, 0, 1, 1], [], []>} : vector<200x128xbf16>, vector<128x128xbf16>, vector<200x128xf32> -> vector<200x128xf32>
    %7 = arith.addf %3, %6 : vector<200x128xf32>
    %c0_6 = arith.constant 0 : index
    %c0_7 = arith.constant 0 : index
    %8 = vector.load %arg7[%c0_6, %c0_7] : memref<200x128xf32, #tpu.memory_space<vmem>>, vector<200x128xf32>
    tpu.vector_store %arg7[%c0_6, %c0_7], %7 {strides = array<i32>} : memref<200x128xf32, #tpu.memory_space<vmem>>, vector<200x128xf32>,
    %c0_i32_8 = arith.constant 0 : i32
    %9 = arith.cmpi eq, %arg2, %c0_i32_8 : i32
    %10 = arith.extui %9 : i1 to i32
    %c0_i32_9 = arith.constant 0 : i32
    %11 = arith.cmpi ne, %10, %c0_i32_9 : i32
    scf.if %11 {
      %c0_10 = arith.constant 0 : index
      %c0_11 = arith.constant 0 : index
      %12 = vector.load %arg7[%c0_10, %c0_11] : memref<200x128xf32, #tpu.memory_space<vmem>>, vector<200x128xf32>
      %c0_12 = arith.constant 0 : index
      %c0_13 = arith.constant 0 : index
      %13 = vector.load %arg5[%c0_12, %c0_13] : memref<1x128xf32, #tpu.memory_space<vmem>>, vector<1x128xf32>
      %14 = vector.broadcast %13 : vector<1x128xf32> to vector<200x128xf32>
      %15 = arith.addf %12, %14 : vector<200x128xf32>
      %cst_14 = arith.constant 0.000000e+00 : f32
      %16 = vector.broadcast %cst_14 : f32 to vector<200x128xf32>
      %17 = arith.maximumf %15, %16 : vector<200x128xf32>
      %18 = arith.truncf %17 : vector<200x128xf32> to vector<200x128xbf16>
      %c0_15 = arith.constant 0 : index
      %c0_16 = arith.constant 0 : index
      %19 = vector.load %arg6[%c0_15, %c0_16] : memref<200x128xbf16, #tpu.memory_space<vmem>>, vector<200x128xbf16>
      tpu.vector_store %arg6[%c0_15, %c0_16], %18 {strides = array<i32>} : memref<200x128xbf16, #tpu.memory_space<vmem>>, vector<200x128xbf16>,
    } else {
    }
    return
  }
  func.func @transform_0(%arg0: i32, %arg1: i32, %arg2: i32) -> (i32, i32) {
    %c0_i32 = arith.constant 0 : i32
    return %arg0, %arg2 : i32, i32
  }
  func.func @transform_1(%arg0: i32, %arg1: i32, %arg2: i32) -> (i32, i32) {
    %c0_i32 = arith.constant 0 : i32
    return %arg2, %arg1 : i32, i32
  }
  func.func @transform_2(%arg0: i32, %arg1: i32, %arg2: i32) -> (i32, i32) {
    %c0_i32 = arith.constant 0 : i32
    %c0_i32_0 = arith.constant 0 : i32
    return %c0_i32, %arg1 : i32, i32
  }
  func.func @transform_3(%arg0: i32, %arg1: i32, %arg2: i32) -> (i32, i32) {
    %c0_i32 = arith.constant 0 : i32
    return %arg0, %arg1 : i32, i32
  }
}

module attributes {stable_mosaic.version = 11 : i64} {
  func.func @_matmul_kernel(%arg0: i32, %arg1: i32, %arg2: i32, %arg3: memref<32x1024xbf16, #tpu.memory_space<vmem>>, %arg4: memref<1024x128xbf16, #tpu.memory_space<vmem>>, %arg5: memref<32x128xbf16, #tpu.memory_space<vmem>>, %arg6: memref<32x128xf32, #tpu.memory_space<vmem>>) attributes {dimension_semantics = [#tpu.dimension_semantics<parallel>, #tpu.dimension_semantics<parallel>, #tpu.dimension_semantics<arbitrary>], iteration_bounds = array<i64: 1, 1, 1>, scalar_prefetch = 0 : i64, scratch_operands = 1 : i64, tpu.core_type = #tpu.core_type<tc>, window_params = [{transform_indices = @transform_0, window_bounds = array<i64: 32, 1024>}, {transform_indices = @transform_1, window_bounds = array<i64: 1024, 128>}, {transform_indices = @transform_2, window_bounds = array<i64: 32, 128>}]} {
    %c0_i32 = arith.constant 0 : i32
    %0 = arith.cmpi eq, %arg2, %c0_i32 : i32
    %1 = arith.extui %0 : i1 to i32
    %c0_i32_0 = arith.constant 0 : i32
    %2 = arith.cmpi ne, %1, %c0_i32_0 : i32
    scf.if %2 {
      %cst_10 = arith.constant 0.000000e+00 : f32
      %12 = vector.broadcast %cst_10 : f32 to vector<32x128xf32>
      %c0_11 = arith.constant 0 : index
      %c0_12 = arith.constant 0 : index
      %13 = vector.load %arg6[%c0_11, %c0_12] : memref<32x128xf32, #tpu.memory_space<vmem>>, vector<32x128xf32>
      tpu.vector_store %arg6[%c0_11, %c0_12], %12 {strides = array<i32>} : memref<32x128xf32, #tpu.memory_space<vmem>>, vector<32x128xf32>,
    } else {
    }
    %c0 = arith.constant 0 : index
    %c0_1 = arith.constant 0 : index
    %3 = vector.load %arg6[%c0, %c0_1] : memref<32x128xf32, #tpu.memory_space<vmem>>, vector<32x128xf32>
    %c0_2 = arith.constant 0 : index
    %c0_3 = arith.constant 0 : index
    %4 = vector.load %arg3[%c0_2, %c0_3] : memref<32x1024xbf16, #tpu.memory_space<vmem>>, vector<32x1024xbf16>
    %c0_4 = arith.constant 0 : index
    %c0_5 = arith.constant 0 : index
    %5 = vector.load %arg4[%c0_4, %c0_5] : memref<1024x128xbf16, #tpu.memory_space<vmem>>, vector<1024x128xbf16>
    %cst = arith.constant dense<0.000000e+00> : vector<32x128xf32>
    %6 = tpu.matmul %4, %5, %cst {dimension_numbers = #tpu.dot_dimension_numbers<[1], [0], [0], [1], [0, 0, 1, 1], [], []>} : vector<32x1024xbf16>, vector<1024x128xbf16>, vector<32x128xf32> -> vector<32x128xf32>
    %7 = arith.addf %3, %6 : vector<32x128xf32>
    %c0_6 = arith.constant 0 : index
    %c0_7 = arith.constant 0 : index
    %8 = vector.load %arg6[%c0_6, %c0_7] : memref<32x128xf32, #tpu.memory_space<vmem>>, vector<32x128xf32>
    tpu.vector_store %arg6[%c0_6, %c0_7], %7 {strides = array<i32>} : memref<32x128xf32, #tpu.memory_space<vmem>>, vector<32x128xf32>,
    %c0_i32_8 = arith.constant 0 : i32
    %9 = arith.cmpi eq, %arg2, %c0_i32_8 : i32
    %10 = arith.extui %9 : i1 to i32
    %c0_i32_9 = arith.constant 0 : i32
    %11 = arith.cmpi ne, %10, %c0_i32_9 : i32
    scf.if %11 {
      %c0_10 = arith.constant 0 : index
      %c0_11 = arith.constant 0 : index
      %12 = vector.load %arg6[%c0_10, %c0_11] : memref<32x128xf32, #tpu.memory_space<vmem>>, vector<32x128xf32>
      %13 = arith.truncf %12 : vector<32x128xf32> to vector<32x128xbf16>
      %c0_12 = arith.constant 0 : index
      %c0_13 = arith.constant 0 : index
      %14 = vector.load %arg5[%c0_12, %c0_13] : memref<32x128xbf16, #tpu.memory_space<vmem>>, vector<32x128xbf16>
      tpu.vector_store %arg5[%c0_12, %c0_13], %13 {strides = array<i32>} : memref<32x128xbf16, #tpu.memory_space<vmem>>, vector<32x128xbf16>,
    } else {
    }
    return
  }
  func.func @transform_0(%arg0: i32, %arg1: i32, %arg2: i32) -> (i32, i32) {
    %c0_i32 = arith.constant 0 : i32
    return %arg0, %arg2 : i32, i32
  }
  func.func @transform_1(%arg0: i32, %arg1: i32, %arg2: i32) -> (i32, i32) {
    %c0_i32 = arith.constant 0 : i32
    return %arg2, %arg1 : i32, i32
  }
  func.func @transform_2(%arg0: i32, %arg1: i32, %arg2: i32) -> (i32, i32) {
    %c0_i32 = arith.constant 0 : i32
    return %arg0, %arg1 : i32, i32
  }
}

module attributes {stable_mosaic.version = 11 : i64} {
  func.func @_bn_stats_kernel(%arg0: i32, %arg1: i32, %arg2: memref<16x128xbf16, #tpu.memory_space<vmem>>, %arg3: memref<8x128xf32, #tpu.memory_space<vmem>>) attributes {dimension_semantics = [#tpu.dimension_semantics<parallel>, #tpu.dimension_semantics<arbitrary>], iteration_bounds = array<i64: 2, 1>, scalar_prefetch = 0 : i64, scratch_operands = 0 : i64, tpu.core_type = #tpu.core_type<tc>, window_params = [{transform_indices = @transform_0, window_bounds = array<i64: 16, 128>}, {transform_indices = @transform_1, window_bounds = array<i64: 8, 128>}]} {
    %c0_i32 = arith.constant 0 : i32
    %0 = arith.cmpi eq, %arg1, %c0_i32 : i32
    %1 = arith.extui %0 : i1 to i32
    %c0_i32_0 = arith.constant 0 : i32
    %2 = arith.cmpi ne, %1, %c0_i32_0 : i32
    scf.if %2 {
      %cst_10 = arith.constant 0.000000e+00 : f32
      %16 = vector.broadcast %cst_10 : f32 to vector<8x128xf32>
      %c0_11 = arith.constant 0 : index
      %c0_12 = arith.constant 0 : index
      %17 = vector.load %arg3[%c0_11, %c0_12] : memref<8x128xf32, #tpu.memory_space<vmem>>, vector<8x128xf32>
      tpu.vector_store %arg3[%c0_11, %c0_12], %16 {strides = array<i32>} : memref<8x128xf32, #tpu.memory_space<vmem>>, vector<8x128xf32>,
    } else {
    }
    %c0 = arith.constant 0 : index
    %c0_1 = arith.constant 0 : index
    %3 = vector.load %arg2[%c0, %c0_1] : memref<16x128xbf16, #tpu.memory_space<vmem>>, vector<16x128xbf16>
    %4 = arith.extf %3 : vector<16x128xbf16> to vector<16x128xf32>
    %c0_2 = arith.constant 0 : index
    %c0_3 = arith.constant 0 : index
    %5 = vector.load %arg3[%c0_2, %c0_3] : memref<8x128xf32, #tpu.memory_space<vmem>>, vector<1x128xf32>
    %cst = arith.constant dense<0.000000e+00> : vector<128xf32>
    %6 = vector.multi_reduction <add>, %4, %cst [0] : vector<16x128xf32> to vector<128xf32>
    %7 = vector.shape_cast %6 : vector<128xf32> to vector<1x128xf32>
    %8 = arith.addf %5, %7 : vector<1x128xf32>
    %c0_4 = arith.constant 0 : index
    %c0_5 = arith.constant 0 : index
    %9 = vector.load %arg3[%c0_4, %c0_5] : memref<8x128xf32, #tpu.memory_space<vmem>>, vector<1x128xf32>
    tpu.vector_store %arg3[%c0_4, %c0_5], %8 {strides = array<i32>} : memref<8x128xf32, #tpu.memory_space<vmem>>, vector<1x128xf32>,
    %c1 = arith.constant 1 : index
    %c0_6 = arith.constant 0 : index
    %10 = vector.load %arg3[%c1, %c0_6] : memref<8x128xf32, #tpu.memory_space<vmem>>, vector<1x128xf32>
    %11 = arith.mulf %4, %4 : vector<16x128xf32>
    %cst_7 = arith.constant dense<0.000000e+00> : vector<128xf32>
    %12 = vector.multi_reduction <add>, %11, %cst_7 [0] : vector<16x128xf32> to vector<128xf32>
    %13 = vector.shape_cast %12 : vector<128xf32> to vector<1x128xf32>
    %14 = arith.addf %10, %13 : vector<1x128xf32>
    %c1_8 = arith.constant 1 : index
    %c0_9 = arith.constant 0 : index
    %15 = vector.load %arg3[%c1_8, %c0_9] : memref<8x128xf32, #tpu.memory_space<vmem>>, vector<1x128xf32>
    tpu.vector_store %arg3[%c1_8, %c0_9], %14 {strides = array<i32>} : memref<8x128xf32, #tpu.memory_space<vmem>>, vector<1x128xf32>,
    return
  }
  func.func @transform_0(%arg0: i32, %arg1: i32) -> (i32, i32) {
    %c1_i32 = arith.constant 1 : i32
    %0 = arith.muli %arg0, %c1_i32 : i32
    %1 = arith.addi %0, %arg1 : i32
    %c0_i32 = arith.constant 0 : i32
    %c0_i32_0 = arith.constant 0 : i32
    return %1, %c0_i32 : i32, i32
  }
  func.func @transform_1(%arg0: i32, %arg1: i32) -> (i32, i32) {
    %c0_i32 = arith.constant 0 : i32
    %c0_i32_0 = arith.constant 0 : i32
    return %arg0, %c0_i32 : i32, i32
  }
}

module attributes {stable_mosaic.version = 11 : i64} {
  func.func @_bn_apply_relu_kernel(%arg0: i32, %arg1: memref<16x128xbf16, #tpu.memory_space<vmem>>, %arg2: memref<1x128xf32, #tpu.memory_space<vmem>>, %arg3: memref<1x128xf32, #tpu.memory_space<vmem>>, %arg4: memref<16x128xbf16, #tpu.memory_space<vmem>>) attributes {dimension_semantics = [#tpu.dimension_semantics<parallel>], iteration_bounds = array<i64: 2>, scalar_prefetch = 0 : i64, scratch_operands = 0 : i64, tpu.core_type = #tpu.core_type<tc>, window_params = [{transform_indices = @transform_0, window_bounds = array<i64: 16, 128>}, {pipeline_mode = #tpu.pipeline_mode<synchronous>, transform_indices = @transform_1, window_bounds = array<i64: 1, 128>}, {pipeline_mode = #tpu.pipeline_mode<synchronous>, transform_indices = @transform_2, window_bounds = array<i64: 1, 128>}, {transform_indices = @transform_3, window_bounds = array<i64: 16, 128>}]} {
    %c0 = arith.constant 0 : index
    %c0_0 = arith.constant 0 : index
    %0 = vector.load %arg1[%c0, %c0_0] : memref<16x128xbf16, #tpu.memory_space<vmem>>, vector<16x128xbf16>
    %1 = arith.extf %0 : vector<16x128xbf16> to vector<16x128xf32>
    %c0_1 = arith.constant 0 : index
    %c0_2 = arith.constant 0 : index
    %2 = vector.load %arg2[%c0_1, %c0_2] : memref<1x128xf32, #tpu.memory_space<vmem>>, vector<1x128xf32>
    %3 = vector.broadcast %2 : vector<1x128xf32> to vector<16x128xf32>
    %4 = arith.mulf %1, %3 : vector<16x128xf32>
    %c0_3 = arith.constant 0 : index
    %c0_4 = arith.constant 0 : index
    %5 = vector.load %arg3[%c0_3, %c0_4] : memref<1x128xf32, #tpu.memory_space<vmem>>, vector<1x128xf32>
    %6 = vector.broadcast %5 : vector<1x128xf32> to vector<16x128xf32>
    %7 = arith.addf %4, %6 : vector<16x128xf32>
    %cst = arith.constant 0.000000e+00 : f32
    %8 = vector.broadcast %cst : f32 to vector<16x128xf32>
    %9 = arith.maximumf %7, %8 : vector<16x128xf32>
    %10 = arith.truncf %9 : vector<16x128xf32> to vector<16x128xbf16>
    %c0_5 = arith.constant 0 : index
    %c0_6 = arith.constant 0 : index
    %11 = vector.load %arg4[%c0_5, %c0_6] : memref<16x128xbf16, #tpu.memory_space<vmem>>, vector<16x128xbf16>
    tpu.vector_store %arg4[%c0_5, %c0_6], %10 {strides = array<i32>} : memref<16x128xbf16, #tpu.memory_space<vmem>>, vector<16x128xbf16>,
    return
  }
  func.func @transform_0(%arg0: i32) -> (i32, i32) {
    %c0_i32 = arith.constant 0 : i32
    %c0_i32_0 = arith.constant 0 : i32
    return %arg0, %c0_i32 : i32, i32
  }
  func.func @transform_1(%arg0: i32) -> (i32, i32) {
    %c0_i32 = arith.constant 0 : i32
    %c0_i32_0 = arith.constant 0 : i32
    %c0_i32_1 = arith.constant 0 : i32
    return %c0_i32, %c0_i32_0 : i32, i32
  }
  func.func @transform_2(%arg0: i32) -> (i32, i32) {
    %c0_i32 = arith.constant 0 : i32
    %c0_i32_0 = arith.constant 0 : i32
    %c0_i32_1 = arith.constant 0 : i32
    return %c0_i32, %c0_i32_0 : i32, i32
  }
  func.func @transform_3(%arg0: i32) -> (i32, i32) {
    %c0_i32 = arith.constant 0 : i32
    %c0_i32_0 = arith.constant 0 : i32
    return %arg0, %c0_i32 : i32, i32
  }
}

module attributes {stable_mosaic.version = 11 : i64} {
  func.func @_linear_partial_kernel(%arg0: i32, %arg1: i32, %arg2: memref<8x1024xbf16, #tpu.memory_space<vmem>>, %arg3: memref<1x1024xbf16, #tpu.memory_space<vmem>>, %arg4: memref<8x128xf32, #tpu.memory_space<vmem>>, %arg5: memref<8x128xf32, #tpu.memory_space<vmem>>) attributes {dimension_semantics = [#tpu.dimension_semantics<parallel>, #tpu.dimension_semantics<arbitrary>], iteration_bounds = array<i64: 2, 1>, scalar_prefetch = 0 : i64, scratch_operands = 1 : i64, tpu.core_type = #tpu.core_type<tc>, window_params = [{transform_indices = @transform_0, window_bounds = array<i64: 8, 1024>}, {transform_indices = @transform_1, window_bounds = array<i64: 1, 1024>}, {transform_indices = @transform_2, window_bounds = array<i64: 8, 128>}]} {
    %c0_i32 = arith.constant 0 : i32
    %0 = arith.cmpi eq, %arg1, %c0_i32 : i32
    %1 = arith.extui %0 : i1 to i32
    %c0_i32_0 = arith.constant 0 : i32
    %2 = arith.cmpi ne, %1, %c0_i32_0 : i32
    scf.if %2 {
      %cst_10 = arith.constant 0.000000e+00 : f32
      %18 = vector.broadcast %cst_10 : f32 to vector<8x128xf32>
      %c0_11 = arith.constant 0 : index
      %c0_12 = arith.constant 0 : index
      %19 = vector.load %arg5[%c0_11, %c0_12] : memref<8x128xf32, #tpu.memory_space<vmem>>, vector<8x128xf32>
      tpu.vector_store %arg5[%c0_11, %c0_12], %18 {strides = array<i32>} : memref<8x128xf32, #tpu.memory_space<vmem>>, vector<8x128xf32>,
    } else {
    }
    %c0 = arith.constant 0 : index
    %c0_1 = arith.constant 0 : index
    %3 = vector.load %arg2[%c0, %c0_1] : memref<8x1024xbf16, #tpu.memory_space<vmem>>, vector<8x1024xbf16>
    %4 = arith.extf %3 : vector<8x1024xbf16> to vector<8x1024xf32>
    %c0_2 = arith.constant 0 : index
    %c0_3 = arith.constant 0 : index
    %5 = vector.load %arg3[%c0_2, %c0_3] : memref<1x1024xbf16, #tpu.memory_space<vmem>>, vector<1x1024xbf16>
    %6 = arith.extf %5 : vector<1x1024xbf16> to vector<1x1024xf32>
    %c0_4 = arith.constant 0 : index
    %c0_5 = arith.constant 0 : index
    %7 = vector.load %arg5[%c0_4, %c0_5] : memref<8x128xf32, #tpu.memory_space<vmem>>, vector<8x128xf32>
    %8 = vector.broadcast %6 : vector<1x1024xf32> to vector<8x1024xf32>
    %9 = arith.mulf %4, %8 : vector<8x1024xf32>
    %cst = arith.constant dense<0.000000e+00> : vector<8xf32>
    %10 = vector.multi_reduction <add>, %9, %cst [1] : vector<8x1024xf32> to vector<8xf32>
    %11 = vector.shape_cast %10 : vector<8xf32> to vector<8x1xf32>
    %12 = vector.broadcast %11 : vector<8x1xf32> to vector<8x128xf32>
    %13 = arith.addf %7, %12 : vector<8x128xf32>
    %c0_6 = arith.constant 0 : index
    %c0_7 = arith.constant 0 : index
    %14 = vector.load %arg5[%c0_6, %c0_7] : memref<8x128xf32, #tpu.memory_space<vmem>>, vector<8x128xf32>
    tpu.vector_store %arg5[%c0_6, %c0_7], %13 {strides = array<i32>} : memref<8x128xf32, #tpu.memory_space<vmem>>, vector<8x128xf32>,
    %c0_i32_8 = arith.constant 0 : i32
    %15 = arith.cmpi eq, %arg1, %c0_i32_8 : i32
    %16 = arith.extui %15 : i1 to i32
    %c0_i32_9 = arith.constant 0 : i32
    %17 = arith.cmpi ne, %16, %c0_i32_9 : i32
    scf.if %17 {
      %c0_10 = arith.constant 0 : index
      %c0_11 = arith.constant 0 : index
      %18 = vector.load %arg5[%c0_10, %c0_11] : memref<8x128xf32, #tpu.memory_space<vmem>>, vector<8x128xf32>
      %c0_12 = arith.constant 0 : index
      %c0_13 = arith.constant 0 : index
      %19 = vector.load %arg4[%c0_12, %c0_13] : memref<8x128xf32, #tpu.memory_space<vmem>>, vector<8x128xf32>
      tpu.vector_store %arg4[%c0_12, %c0_13], %18 {strides = array<i32>} : memref<8x128xf32, #tpu.memory_space<vmem>>, vector<8x128xf32>,
    } else {
    }
    return
  }
  func.func @transform_0(%arg0: i32, %arg1: i32) -> (i32, i32) {
    %c1_i32 = arith.constant 1 : i32
    %0 = arith.muli %arg0, %c1_i32 : i32
    %1 = arith.addi %0, %arg1 : i32
    %c0_i32 = arith.constant 0 : i32
    %c0_i32_0 = arith.constant 0 : i32
    return %c0_i32, %1 : i32, i32
  }
  func.func @transform_1(%arg0: i32, %arg1: i32) -> (i32, i32) {
    %c1_i32 = arith.constant 1 : i32
    %0 = arith.muli %arg0, %c1_i32 : i32
    %1 = arith.addi %0, %arg1 : i32
    %c0_i32 = arith.constant 0 : i32
    %c0_i32_0 = arith.constant 0 : i32
    return %c0_i32, %1 : i32, i32
  }
  func.func @transform_2(%arg0: i32, %arg1: i32) -> (i32, i32) {
    %c0_i32 = arith.constant 0 : i32
    %c0_i32_0 = arith.constant 0 : i32
    return %arg0, %c0_i32 : i32, i32
  }
}

</mosaic_0001>

<llo_original>
// kernel: discriminator_forward.5
$region0: #{discriminator_forward.5}
  #allocation0 [shape = 'u32[]', space=smem, size = 0x4, offset = 0x4, fixed_abs, tag = 'smem constant byte address 0x4 - core index']
  #allocation1 [shape = 'u32[144,128]{1,0:T(1,128)}', space=vmem, size = 0x12000, scoped, tag = 'internal scratch']
  #allocation2 [shape = 'f32[200,128]{1,0:T(8,128)}', space=vmem, size = 0x19000, scoped, tag = 'scratch operand']
  %s0 = inlined_call_operand.vmem [shape: bf16[200,128], index: 0, kind: input, shape index: {}]
  %s1 = inlined_call_operand.vmem [shape: bf16[128,128], index: 1, kind: input, shape index: {}]
  %s2 = inlined_call_operand.vmem [shape: f32[1,128], index: 2, kind: input, shape index: {}]
  %s3 = inlined_call_operand.vmem [shape: bf16[200,128], index: 3, kind: output, shape index: {}]
  %s4 = sld [smem:[#allocation0]]
  $region30: #{discriminator_forward.5} parent=0
    _
  %s6 = ssub.s32 1, %s4
  %s7 = scalar_select 0, %s6, %s4
  // Predicated region
  $region2: #{discriminator_forward.5} parent=0 // pred_check
    _
  $region3: #{discriminator_forward.5} parent=0 // pred_check_branch
    %9 = sbr.rel (0) target = $region5
  $region4: #{discriminator_forward.5} parent=0 // pred_region
    _
  $region5: #{discriminator_forward.5} parent=0 // pred_fallthru
    _
  // Predicated region
  $region6: #{discriminator_forward.5} parent=0 // pred_check
    _
  $region7: #{discriminator_forward.5} parent=0 // pred_check_branch
    %11 = sbr.rel (0) target = $region9
  $region8: #{discriminator_forward.5} parent=0 // pred_region
    _
  $region9: #{discriminator_forward.5} parent=0 // pred_fallthru
    _
  // Predicated region
  $region10: #{discriminator_forward.5} parent=0 // pred_check
    _
  $region11: #{discriminator_forward.5} parent=0 // pred_check_branch
    %13 = sbr.rel (0) target = $region13
  $region12: #{discriminator_forward.5} parent=0 // pred_region
    _
  $region13: #{discriminator_forward.5} parent=0 // pred_fallthru
    _
  %p15 = scmp.eq.s32.totalorder 0, 0
  // Predicated region
  $region14: #{discriminator_forward.5} parent=0 // pred_check
    %p16 = pneg %p15
  $region15: #{discriminator_forward.5} parent=0 // pred_check_branch
    %18 = sbr.rel (%p16) target = $region17
  $region16: #{discriminator_forward.5} parent=0 // pred_region
    %19 = vst [vmem:[#allocation2] sm:$0xff] 0.0
    %20 = vst [vmem:[#allocation2 + $0x8] sm:$0xff] 0.0
    %21 = vst [vmem:[#allocation2 + $0x10] sm:$0xff] 0.0
    %22 = vst [vmem:[#allocation2 + $0x18] sm:$0xff] 0.0
    %23 = vst [vmem:[#allocation2 + $0x20] sm:$0xff] 0.0
    %24 = vst [vmem:[#allocation2 + $0x28] sm:$0xff] 0.0
    %25 = vst [vmem:[#allocation2 + $0x30] sm:$0xff] 0.0
    %26 = vst [vmem:[#allocation2 + $0x38] sm:$0xff] 0.0
    %27 = vst [vmem:[#allocation2 + $0x40] sm:$0xff] 0.0
    %28 = vst [vmem:[#allocation2 + $0x48] sm:$0xff] 0.0
    %29 = vst [vmem:[#allocation2 + $0x50] sm:$0xff] 0.0
    %30 = vst [vmem:[#allocation2 + $0x58] sm:$0xff] 0.0
    %31 = vst [vmem:[#allocation2 + $0x60] sm:$0xff] 0.0
    %32 = vst [vmem:[#allocation2 + $0x68] sm:$0xff] 0.0
    %33 = vst [vmem:[#allocation2 + $0x70] sm:$0xff] 0.0
    %34 = vst [vmem:[#allocation2 + $0x78] sm:$0xff] 0.0
    %35 = vst [vmem:[#allocation2 + $0x80] sm:$0xff] 0.0
    %36 = vst [vmem:[#allocation2 + $0x88] sm:$0xff] 0.0
    %37 = vst [vmem:[#allocation2 + $0x90] sm:$0xff] 0.0
    %38 = vst [vmem:[#allocation2 + $0x98] sm:$0xff] 0.0
    %39 = vst [vmem:[#allocation2 + $0xa0] sm:$0xff] 0.0
    %40 = vst [vmem:[#allocation2 + $0xa8] sm:$0xff] 0.0
    %41 = vst [vmem:[#allocation2 + $0xb0] sm:$0xff] 0.0
    %42 = vst [vmem:[#allocation2 + $0xb8] sm:$0xff] 0.0
    %43 = vst [vmem:[#allocation2 + $0xc0] sm:$0xff] 0.0
  $region17: #{discriminator_forward.5} parent=0 // pred_fallthru
    _
  %v44 = vld [vmem:[#allocation2] sm:$0xff]
  %v45 = vld [vmem:[#allocation2 + $0x8] sm:$0xff]
  %v46 = vld [vmem:[#allocation2 + $0x10] sm:$0xff]
  %v47 = vld [vmem:[#allocation2 + $0x18] sm:$0xff]
  %v48 = vld [vmem:[#allocation2 + $0x20] sm:$0xff]
  %v49 = vld [vmem:[#allocation2 + $0x28] sm:$0xff]
  %v50 = vld [vmem:[#allocation2 + $0x30] sm:$0xff]
  %v51 = vld [vmem:[#allocation2 + $0x38] sm:$0xff]
  %v52 = vld [vmem:[#allocation2 + $0x40] sm:$0xff]
  %v53 = vld [vmem:[#allocation2 + $0x48] sm:$0xff]
  %v54 = vld [vmem:[#allocation2 + $0x50] sm:$0xff]
  %v55 = vld [vmem:[#allocation2 + $0x58] sm:$0xff]
  %v56 = vld [vmem:[#allocation2 + $0x60] sm:$0xff]
  %v57 = vld [vmem:[#allocation2 + $0x68] sm:$0xff]
  %v58 = vld [vmem:[#allocation2 + $0x70] sm:$0xff]
  %v59 = vld [vmem:[#allocation2 + $0x78] sm:$0xff]
  %v60 = vld [vmem:[#allocation2 + $0x80] sm:$0xff]
  %v61 = vld [vmem:[#allocation2 + $0x88] sm:$0xff]
  %v62 = vld [vmem:[#allocation2 + $0x90] sm:$0xff]
  %v63 = vld [vmem:[#allocation2 + $0x98] sm:$0xff]
  %v64 = vld [vmem:[#allocation2 + $0xa0] sm:$0xff]
  %v65 = vld [vmem:[#allocation2 + $0xa8] sm:$0xff]
  %v66 = vld [vmem:[#allocation2 + $0xb0] sm:$0xff]
  %v67 = vld [vmem:[#allocation2 + $0xb8] sm:$0xff]
  %v68 = vld [vmem:[#allocation2 + $0xc0] sm:$0xff]
  %v69 = vld [vmem:[%s0] sm:$0xf]
  %v70 = vld [vmem:[%s0 + $0x4] sm:$0xf]
  %v71 = vld [vmem:[%s0 + $0x8] sm:$0xf]
  %v72 = vld [vmem:[%s0 + $0xc] sm:$0xf]
  %v73 = vld [vmem:[%s0 + $0x10] sm:$0xf]
  %v74 = vld [vmem:[%s0 + $0x14] sm:$0xf]
  %v75 = vld [vmem:[%s0 + $0x18] sm:$0xf]
  %v76 = vld [vmem:[%s0 + $0x1c] sm:$0xf]
  %v77 = vld [vmem:[%s0 + $0x20] sm:$0xf]
  %v78 = vld [vmem:[%s0 + $0x24] sm:$0xf]
  %v79 = vld [vmem:[%s0 + $0x28] sm:$0xf]
  %v80 = vld [vmem:[%s0 + $0x2c] sm:$0xf]
  %v81 = vld [vmem:[%s0 + $0x30] sm:$0xf]
  %v82 = vld [vmem:[%s0 + $0x34] sm:$0xf]
  %v83 = vld [vmem:[%s0 + $0x38] sm:$0xf]
  %v84 = vld [vmem:[%s0 + $0x3c] sm:$0xf]
  %v85 = vld [vmem:[%s0 + $0x40] sm:$0xf]
  %v86 = vld [vmem:[%s0 + $0x44] sm:$0xf]
  %v87 = vld [vmem:[%s0 + $0x48] sm:$0xf]
  %v88 = vld [vmem:[%s0 + $0x4c] sm:$0xf]
  %v89 = vld [vmem:[%s0 + $0x50] sm:$0xf]
  %v90 = vld [vmem:[%s0 + $0x54] sm:$0xf]
  %v91 = vld [vmem:[%s0 + $0x58] sm:$0xf]
  %v92 = vld [vmem:[%s0 + $0x5c] sm:$0xf]
  %v93 = vld [vmem:[%s0 + $0x60] sm:$0xf]
  %v94 = vld [vmem:[%s1] sm:$0xf]
  %v95 = vld [vmem:[%s1 + $0x4] sm:$0xf]
  %v96 = vld [vmem:[%s1 + $0x8] sm:$0xf]
  %v97 = vld [vmem:[%s1 + $0xc] sm:$0xf]
  %v98 = vld [vmem:[%s1 + $0x10] sm:$0xf]
  %v99 = vld [vmem:[%s1 + $0x14] sm:$0xf]
  %v100 = vld [vmem:[%s1 + $0x18] sm:$0xf]
  %v101 = vld [vmem:[%s1 + $0x1c] sm:$0xf]
  %v102 = vld [vmem:[%s1 + $0x20] sm:$0xf]
  %v103 = vld [vmem:[%s1 + $0x24] sm:$0xf]
  %v104 = vld [vmem:[%s1 + $0x28] sm:$0xf]
  %v105 = vld [vmem:[%s1 + $0x2c] sm:$0xf]
  %v106 = vld [vmem:[%s1 + $0x30] sm:$0xf]
  %v107 = vld [vmem:[%s1 + $0x34] sm:$0xf]
  %v108 = vld [vmem:[%s1 + $0x38] sm:$0xf]
  %v109 = vld [vmem:[%s1 + $0x3c] sm:$0xf]
  %v135 = vunpack.c.l.b16 %v69
  %v136 = vunpack.c.l.b16 %v70
  %v137 = vunpack.c.l.b16 %v71
  %v138 = vunpack.c.l.b16 %v72
  %v139 = vunpack.c.l.b16 %v73
  %v140 = vunpack.c.l.b16 %v74
  %v141 = vunpack.c.l.b16 %v75
  %v142 = vunpack.c.l.b16 %v76
  %v143 = vunpack.c.l.b16 %v77
  %v144 = vunpack.c.l.b16 %v78
  %v145 = vunpack.c.l.b16 %v79
  %v146 = vunpack.c.l.b16 %v80
  %v147 = vunpack.c.l.b16 %v81
  %v148 = vunpack.c.l.b16 %v82
  %v149 = vunpack.c.l.b16 %v83
  %v150 = vunpack.c.l.b16 %v84
  %v151 = vunpack.c.l.b16 %v85
  %v152 = vunpack.c.l.b16 %v86
  %v153 = vunpack.c.l.b16 %v87
  %v154 = vunpack.c.l.b16 %v88
  %v155 = vunpack.c.l.b16 %v89
  %v156 = vunpack.c.l.b16 %v90
  %v157 = vunpack.c.l.b16 %v91
  %v158 = vunpack.c.l.b16 %v92
  %v159 = vunpack.c.l.b16 %v93
  %v160 = vpack.c.b16 %v136, %v135
  %v161 = vpack.c.b16 %v138, %v137
  %v162 = vpack.c.b16 %v140, %v139
  %v163 = vpack.c.b16 %v142, %v141
  %v164 = vpack.c.b16 %v144, %v143
  %v165 = vpack.c.b16 %v146, %v145
  %v166 = vpack.c.b16 %v148, %v147
  %v167 = vpack.c.b16 %v150, %v149
  %v168 = vpack.c.b16 %v152, %v151
  %v169 = vpack.c.b16 %v154, %v153
  %v170 = vpack.c.b16 %v156, %v155
  %v171 = vpack.c.b16 %v158, %v157
  %v172 = vpack.c.b16 %v159, %v159
  %v202 = vunpack.c.l.b16 %v94
  %v203 = vunpack.c.l.b16 %v95
  %v204 = vunpack.c.l.b16 %v96
  %v205 = vunpack.c.l.b16 %v97
  %v206 = vunpack.c.l.b16 %v98
  %v207 = vunpack.c.l.b16 %v99
  %v208 = vunpack.c.l.b16 %v100
  %v209 = vunpack.c.l.b16 %v101
  %v210 = vunpack.c.l.b16 %v102
  %v211 = vunpack.c.l.b16 %v103
  %v212 = vunpack.c.l.b16 %v104
  %v213 = vunpack.c.l.b16 %v105
  %v214 = vunpack.c.l.b16 %v106
  %v215 = vunpack.c.l.b16 %v107
  %v216 = vunpack.c.l.b16 %v108
  %v217 = vunpack.c.l.b16 %v109
  %v218 = vpack.c.b16 %v203, %v202
  %v219 = vpack.c.b16 %v205, %v204
  %v220 = vpack.c.b16 %v207, %v206
  %v221 = vpack.c.b16 %v209, %v208
  %v222 = vpack.c.b16 %v211, %v210
  %v223 = vpack.c.b16 %v213, %v212
  %v224 = vpack.c.b16 %v215, %v214
  %v225 = vpack.c.b16 %v217, %v216
  %234 = vmatprep.subr.bf16.mxu0 0
  %235 = vmatpush1.bf16.msra.mxu0 %v225
  %236 = vmatprep.subr.bf16.mxu0 0
  %237 = vmatpush1.bf16.msra.mxu0 %v224
  %238 = vmatprep.subr.bf16.mxu0 0
  %239 = vmatpush1.bf16.msra.mxu0 %v223
  %240 = vmatprep.subr.bf16.mxu0 0
  %241 = vmatpush1.bf16.msra.mxu0 %v222
  %242 = vmatprep.subr.bf16.mxu0 0
  %243 = vmatpush1.bf16.msra.mxu0 %v221
  %244 = vmatprep.subr.bf16.mxu0 0
  %245 = vmatpush1.bf16.msra.mxu0 %v220
  %246 = vmatprep.subr.bf16.mxu0 0
  %247 = vmatpush1.bf16.msra.mxu0 %v219
  %248 = vmatprep.subr.bf16.mxu0 0
  %249 = vmatpush1.bf16.msra.mxu0 %v218
  %250 = vmatprep.subr.bf16.mxu0 0
  %251 = vmatpush2.bf16.msra.mxu0 0
  %252 = vmatprep.subr.bf16.mxu0 0
  %253 = vmatpush2.bf16.msra.mxu0 0
  %254 = vmatprep.subr.bf16.mxu0 0
  %255 = vmatpush2.bf16.msra.mxu0 0
  %256 = vmatprep.subr.bf16.mxu0 0
  %257 = vmatpush2.bf16.msra.mxu0 0
  %258 = vmatprep.subr.bf16.mxu0 0
  %259 = vmatpush2.bf16.msra.mxu0 0
  %260 = vmatprep.subr.bf16.mxu0 0
  %261 = vmatpush2.bf16.msra.mxu0 0
  %262 = vmatprep.subr.bf16.mxu0 0
  %263 = vmatpush2.bf16.msra.mxu0 0
  %264 = vmatprep.subr.bf16.mxu0 0
  %265 = vmatpush2.bf16.msra.mxu0 0
  %266 = vmatprep.mubr.bf16.mxu0 0
  %267 = vmatmul.mubr.bf16.gmra.mxu0 %v160
  %v268 = vpop.f32.mrf.mxu0
  %v269 = vadd.f32 0.0, %v268
  %v270 = vpop.f32.mrf.mxu0
  %v271 = vpop.f32.mrf.mxu0
  %v272 = vadd.f32 0.0, %v271
  %v273 = vpop.f32.mrf.mxu0
  %274 = vmatprep.mubr.bf16.mxu0 0
  %275 = vmatmul.mubr.bf16.gmra.mxu0 %v161
  %v276 = vpop.f32.mrf.mxu0
  %v277 = vadd.f32 0.0, %v276
  %v278 = vpop.f32.mrf.mxu0
  %v279 = vpop.f32.mrf.mxu0
  %v280 = vadd.f32 0.0, %v279
  %v281 = vpop.f32.mrf.mxu0
  %282 = vmatprep.mubr.bf16.mxu0 0
  %283 = vmatmul.mubr.bf16.gmra.mxu0 %v162
  %v284 = vpop.f32.mrf.mxu0
  %v285 = vadd.f32 0.0, %v284
  %v286 = vpop.f32.mrf.mxu0
  %v287 = vpop.f32.mrf.mxu0
  %v288 = vadd.f32 0.0, %v287
  %v289 = vpop.f32.mrf.mxu0
  %290 = vmatprep.mubr.bf16.mxu0 0
  %291 = vmatmul.mubr.bf16.gmra.mxu0 %v163
  %v292 = vpop.f32.mrf.mxu0
  %v293 = vadd.f32 0.0, %v292
  %v294 = vpop.f32.mrf.mxu0
  %v295 = vpop.f32.mrf.mxu0
  %v296 = vadd.f32 0.0, %v295
  %v297 = vpop.f32.mrf.mxu0
  %298 = vmatprep.mubr.bf16.mxu0 0
  %299 = vmatmul.mubr.bf16.gmra.mxu0 %v164
  %v300 = vpop.f32.mrf.mxu0
  %v301 = vadd.f32 0.0, %v300
  %v302 = vpop.f32.mrf.mxu0
  %v303 = vpop.f32.mrf.mxu0
  %v304 = vadd.f32 0.0, %v303
  %v305 = vpop.f32.mrf.mxu0
  %306 = vmatprep.mubr.bf16.mxu0 0
  %307 = vmatmul.mubr.bf16.gmra.mxu0 %v165
  %v308 = vpop.f32.mrf.mxu0
  %v309 = vadd.f32 0.0, %v308
  %v310 = vpop.f32.mrf.mxu0
  %v311 = vpop.f32.mrf.mxu0
  %v312 = vadd.f32 0.0, %v311
  %v313 = vpop.f32.mrf.mxu0
  %314 = vmatprep.mubr.bf16.mxu0 0
  %315 = vmatmul.mubr.bf16.gmra.mxu0 %v166
  %v316 = vpop.f32.mrf.mxu0
  %v317 = vadd.f32 0.0, %v316
  %v318 = vpop.f32.mrf.mxu0
  %v319 = vpop.f32.mrf.mxu0
  %v320 = vadd.f32 0.0, %v319
  %v321 = vpop.f32.mrf.mxu0
  %322 = vmatprep.mubr.bf16.mxu0 0
  %323 = vmatmul.mubr.bf16.gmra.mxu0 %v167
  %v324 = vpop.f32.mrf.mxu0
  %v325 = vadd.f32 0.0, %v324
  %v326 = vpop.f32.mrf.mxu0
  %v327 = vpop.f32.mrf.mxu0
  %v328 = vadd.f32 0.0, %v327
  %v329 = vpop.f32.mrf.mxu0
  %330 = vmatprep.mubr.bf16.mxu0 0
  %331 = vmatmul.mubr.bf16.gmra.mxu0 %v168
  %v332 = vpop.f32.mrf.mxu0
  %v333 = vadd.f32 0.0, %v332
  %v334 = vpop.f32.mrf.mxu0
  %v335 = vpop.f32.mrf.mxu0
  %v336 = vadd.f32 0.0, %v335
  %v337 = vpop.f32.mrf.mxu0
  %338 = vmatprep.mubr.bf16.mxu0 0
  %339 = vmatmul.mubr.bf16.gmra.mxu0 %v169
  %v340 = vpop.f32.mrf.mxu0
  %v341 = vadd.f32 0.0, %v340
  %v342 = vpop.f32.mrf.mxu0
  %v343 = vpop.f32.mrf.mxu0
  %v344 = vadd.f32 0.0, %v343
  %v345 = vpop.f32.mrf.mxu0
  %346 = vmatprep.mubr.bf16.mxu0 0
  %347 = vmatmul.mubr.bf16.gmra.mxu0 %v170
  %v348 = vpop.f32.mrf.mxu0
  %v349 = vadd.f32 0.0, %v348
  %v350 = vpop.f32.mrf.mxu0
  %v351 = vpop.f32.mrf.mxu0
  %v352 = vadd.f32 0.0, %v351
  %v353 = vpop.f32.mrf.mxu0
  %354 = vmatprep.mubr.bf16.mxu0 0
  %355 = vmatmul.mubr.bf16.gmra.mxu0 %v171
  %v356 = vpop.f32.mrf.mxu0
  %v357 = vadd.f32 0.0, %v356
  %v358 = vpop.f32.mrf.mxu0
  %v359 = vpop.f32.mrf.mxu0
  %v360 = vadd.f32 0.0, %v359
  %v361 = vpop.f32.mrf.mxu0
  %362 = vmatprep.mubr.bf16.mxu0 0
  %363 = vmatmul.mubr.bf16.gmra.mxu0 %v172
  %v364 = vpop.f32.mrf.mxu0
  %v365 = vadd.f32 0.0, %v364
  %v366 = vpop.f32.mrf.mxu0
  %v367 = vpop.f32.mrf.mxu0
  %v368 = vpop.f32.mrf.mxu0
  %369 = vdwg.mxu0
  %v370 = vadd.f32 %v44, %v269
  %v371 = vadd.f32 %v45, %v272
  %v372 = vadd.f32 %v46, %v277
  %v373 = vadd.f32 %v47, %v280
  %v374 = vadd.f32 %v48, %v285
  %v375 = vadd.f32 %v49, %v288
  %v376 = vadd.f32 %v50, %v293
  %v377 = vadd.f32 %v51, %v296
  %v378 = vadd.f32 %v52, %v301
  %v379 = vadd.f32 %v53, %v304
  %v380 = vadd.f32 %v54, %v309
  %v381 = vadd.f32 %v55, %v312
  %v382 = vadd.f32 %v56, %v317
  %v383 = vadd.f32 %v57, %v320
  %v384 = vadd.f32 %v58, %v325
  %v385 = vadd.f32 %v59, %v328
  %v386 = vadd.f32 %v60, %v333
  %v387 = vadd.f32 %v61, %v336
  %v388 = vadd.f32 %v62, %v341
  %v389 = vadd.f32 %v63, %v344
  %v390 = vadd.f32 %v64, %v349
  %v391 = vadd.f32 %v65, %v352
  %v392 = vadd.f32 %v66, %v357
  %v393 = vadd.f32 %v67, %v360
  %v394 = vadd.f32 %v68, %v365
  %395 = vst [vmem:[#allocation2] sm:$0xff] %v370
  %396 = vst [vmem:[#allocation2 + $0x8] sm:$0xff] %v371
  %397 = vst [vmem:[#allocation2 + $0x10] sm:$0xff] %v372
  %398 = vst [vmem:[#allocation2 + $0x18] sm:$0xff] %v373
  %399 = vst [vmem:[#allocation2 + $0x20] sm:$0xff] %v374
  %400 = vst [vmem:[#allocation2 + $0x28] sm:$0xff] %v375
  %401 = vst [vmem:[#allocation2 + $0x30] sm:$0xff] %v376
  %402 = vst [vmem:[#allocation2 + $0x38] sm:$0xff] %v377
  %403 = vst [vmem:[#allocation2 + $0x40] sm:$0xff] %v378
  %404 = vst [vmem:[#allocation2 + $0x48] sm:$0xff] %v379
  %405 = vst [vmem:[#allocation2 + $0x50] sm:$0xff] %v380
  %406 = vst [vmem:[#allocation2 + $0x58] sm:$0xff] %v381
  %407 = vst [vmem:[#allocation2 + $0x60] sm:$0xff] %v382
  %408 = vst [vmem:[#allocation2 + $0x68] sm:$0xff] %v383
  %409 = vst [vmem:[#allocation2 + $0x70] sm:$0xff] %v384
  %410 = vst [vmem:[#allocation2 + $0x78] sm:$0xff] %v385
  %411 = vst [vmem:[#allocation2 + $0x80] sm:$0xff] %v386
  %412 = vst [vmem:[#allocation2 + $0x88] sm:$0xff] %v387
  %413 = vst [vmem:[#allocation2 + $0x90] sm:$0xff] %v388
  %414 = vst [vmem:[#allocation2 + $0x98] sm:$0xff] %v389
  %415 = vst [vmem:[#allocation2 + $0xa0] sm:$0xff] %v390
  %416 = vst [vmem:[#allocation2 + $0xa8] sm:$0xff] %v391
  %417 = vst [vmem:[#allocation2 + $0xb0] sm:$0xff] %v392
  %418 = vst [vmem:[#allocation2 + $0xb8] sm:$0xff] %v393
  %419 = vst [vmem:[#allocation2 + $0xc0] sm:$0xff] %v394
  // Predicated region
  $region18: #{discriminator_forward.5} parent=0 // pred_check
    %p420 = pneg %p15
  $region19: #{discriminator_forward.5} parent=0 // pred_check_branch
    %422 = sbr.rel (%p420) target = $region21
  $region20: #{discriminator_forward.5} parent=0 // pred_region
    %v423 = vld [vmem:[#allocation2] sm:$0xff]
    %v424 = vld [vmem:[#allocation2 + $0x8] sm:$0xff]
    %v425 = vld [vmem:[#allocation2 + $0x10] sm:$0xff]
    %v426 = vld [vmem:[#allocation2 + $0x18] sm:$0xff]
    %v427 = vld [vmem:[#allocation2 + $0x20] sm:$0xff]
    %v428 = vld [vmem:[#allocation2 + $0x28] sm:$0xff]
    %v429 = vld [vmem:[#allocation2 + $0x30] sm:$0xff]
    %v430 = vld [vmem:[#allocation2 + $0x38] sm:$0xff]
    %v431 = vld [vmem:[#allocation2 + $0x40] sm:$0xff]
    %v432 = vld [vmem:[#allocation2 + $0x48] sm:$0xff]
    %v433 = vld [vmem:[#allocation2 + $0x50] sm:$0xff]
    %v434 = vld [vmem:[#allocation2 + $0x58] sm:$0xff]
    %v435 = vld [vmem:[#allocation2 + $0x60] sm:$0xff]
    %v436 = vld [vmem:[#allocation2 + $0x68] sm:$0xff]
    %v437 = vld [vmem:[#allocation2 + $0x70] sm:$0xff]
    %v438 = vld [vmem:[#allocation2 + $0x78] sm:$0xff]
    %v439 = vld [vmem:[#allocation2 + $0x80] sm:$0xff]
    %v440 = vld [vmem:[#allocation2 + $0x88] sm:$0xff]
    %v441 = vld [vmem:[#allocation2 + $0x90] sm:$0xff]
    %v442 = vld [vmem:[#allocation2 + $0x98] sm:$0xff]
    %v443 = vld [vmem:[#allocation2 + $0xa0] sm:$0xff]
    %v444 = vld [vmem:[#allocation2 + $0xa8] sm:$0xff]
    %v445 = vld [vmem:[#allocation2 + $0xb0] sm:$0xff]
    %v446 = vld [vmem:[#allocation2 + $0xb8] sm:$0xff]
    %v447 = vld [vmem:[#allocation2 + $0xc0] sm:$0xff]
    %v448 = vld [vmem:[%s2] sm:$0x1]
    %v450 = vlaneseq
    %v451 = vshrl.u32 %v450, 7
    %v452 = vsub.s32 0, %v451
    %v453 = vrot.slane %v448, %v452
    %v455 = vadd.f32 %v423, %v453
    %v456 = vadd.f32 %v424, %v453
    %v457 = vadd.f32 %v425, %v453
    %v458 = vadd.f32 %v426, %v453
    %v459 = vadd.f32 %v427, %v453
    %v460 = vadd.f32 %v428, %v453
    %v461 = vadd.f32 %v429, %v453
    %v462 = vadd.f32 %v430, %v453
    %v463 = vadd.f32 %v431, %v453
    %v464 = vadd.f32 %v432, %v453
    %v465 = vadd.f32 %v433, %v453
    %v466 = vadd.f32 %v434, %v453
    %v467 = vadd.f32 %v435, %v453
    %v468 = vadd.f32 %v436, %v453
    %v469 = vadd.f32 %v437, %v453
    %v470 = vadd.f32 %v438, %v453
    %v471 = vadd.f32 %v439, %v453
    %v472 = vadd.f32 %v440, %v453
    %v473 = vadd.f32 %v441, %v453
    %v474 = vadd.f32 %v442, %v453
    %v475 = vadd.f32 %v443, %v453
    %v476 = vadd.f32 %v444, %v453
    %v477 = vadd.f32 %v445, %v453
    %v478 = vadd.f32 %v446, %v453
    %v479 = vadd.f32 %v447, %v453
    %v480 = vmax.f32 %v455, 0.0
    %v481 = vmax.f32 %v456, 0.0
    %v482 = vmax.f32 %v457, 0.0
    %v483 = vmax.f32 %v458, 0.0
    %v484 = vmax.f32 %v459, 0.0
    %v485 = vmax.f32 %v460, 0.0
    %v486 = vmax.f32 %v461, 0.0
    %v487 = vmax.f32 %v462, 0.0
    %v488 = vmax.f32 %v463, 0.0
    %v489 = vmax.f32 %v464, 0.0
    %v490 = vmax.f32 %v465, 0.0
    %v491 = vmax.f32 %v466, 0.0
    %v492 = vmax.f32 %v467, 0.0
    %v493 = vmax.f32 %v468, 0.0
    %v494 = vmax.f32 %v469, 0.0
    %v495 = vmax.f32 %v470, 0.0
    %v496 = vmax.f32 %v471, 0.0
    %v497 = vmax.f32 %v472, 0.0
    %v498 = vmax.f32 %v473, 0.0
    %v499 = vmax.f32 %v474, 0.0
    %v500 = vmax.f32 %v475, 0.0
    %v501 = vmax.f32 %v476, 0.0
    %v502 = vmax.f32 %v477, 0.0
    %v503 = vmax.f32 %v478, 0.0
    %v504 = vmax.f32 %v479, 0.0
    %v505 = vpack.c.bf16 %v481, %v480
    %v506 = vpack.c.bf16 %v483, %v482
    %v507 = vpack.c.bf16 %v485, %v484
    %v508 = vpack.c.bf16 %v487, %v486
    %v509 = vpack.c.bf16 %v489, %v488
    %v510 = vpack.c.bf16 %v491, %v490
    %v511 = vpack.c.bf16 %v493, %v492
    %v512 = vpack.c.bf16 %v495, %v494
    %v513 = vpack.c.bf16 %v497, %v496
    %v514 = vpack.c.bf16 %v499, %v498
    %v515 = vpack.c.bf16 %v501, %v500
    %v516 = vpack.c.bf16 %v503, %v502
    %v517 = vpack.c.bf16 %v504, %v504
    %v531 = vunpack.c.l.b16 %v505
    %v532 = vunpack.c.h.b16 %v505
    %v533 = vunpack.c.l.b16 %v506
    %v534 = vunpack.c.h.b16 %v506
    %v535 = vunpack.c.l.b16 %v507
    %v536 = vunpack.c.h.b16 %v507
    %v537 = vunpack.c.l.b16 %v508
    %v538 = vunpack.c.h.b16 %v508
    %v539 = vunpack.c.l.b16 %v509
    %v540 = vunpack.c.h.b16 %v509
    %v541 = vunpack.c.l.b16 %v510
    %v542 = vunpack.c.h.b16 %v510
    %v543 = vunpack.c.l.b16 %v511
    %v544 = vunpack.c.h.b16 %v511
    %v545 = vunpack.c.l.b16 %v512
    %v546 = vunpack.c.h.b16 %v512
    %v547 = vunpack.c.l.b16 %v513
    %v548 = vunpack.c.h.b16 %v513
    %v549 = vunpack.c.l.b16 %v514
    %v550 = vunpack.c.h.b16 %v514
    %v551 = vunpack.c.l.b16 %v515
    %v552 = vunpack.c.h.b16 %v515
    %v553 = vunpack.c.l.b16 %v516
    %v554 = vunpack.c.h.b16 %v516
    %v555 = vunpack.c.l.b16 %v517
    %v556 = vpack.c.b16 %v531, %v531
    %v557 = vpack.c.b16 %v532, %v532
    %v558 = vpack.c.b16 %v533, %v533
    %v559 = vpack.c.b16 %v534, %v534
    %v560 = vpack.c.b16 %v535, %v535
    %v561 = vpack.c.b16 %v536, %v536
    %v562 = vpack.c.b16 %v537, %v537
    %v563 = vpack.c.b16 %v538, %v538
    %v564 = vpack.c.b16 %v539, %v539
    %v565 = vpack.c.b16 %v540, %v540
    %v566 = vpack.c.b16 %v541, %v541
    %v567 = vpack.c.b16 %v542, %v542
    %v568 = vpack.c.b16 %v543, %v543
    %v569 = vpack.c.b16 %v544, %v544
    %v570 = vpack.c.b16 %v545, %v545
    %v571 = vpack.c.b16 %v546, %v546
    %v572 = vpack.c.b16 %v547, %v547
    %v573 = vpack.c.b16 %v548, %v548
    %v574 = vpack.c.b16 %v549, %v549
    %v575 = vpack.c.b16 %v550, %v550
    %v576 = vpack.c.b16 %v551, %v551
    %v577 = vpack.c.b16 %v552, %v552
    %v578 = vpack.c.b16 %v553, %v553
    %v579 = vpack.c.b16 %v554, %v554
    %v580 = vpack.c.b16 %v555, %v555
    %606 = vst [vmem:[%s3] sm:$0xf] %v556
    %607 = vst [vmem:[%s3 + $0x4] sm:$0xf] %v557
    %608 = vst [vmem:[%s3 + $0x8] sm:$0xf] %v558
    %609 = vst [vmem:[%s3 + $0xc] sm:$0xf] %v559
    %610 = vst [vmem:[%s3 + $0x10] sm:$0xf] %v560
    %611 = vst [vmem:[%s3 + $0x14] sm:$0xf] %v561
    %612 = vst [vmem:[%s3 + $0x18] sm:$0xf] %v562
    %613 = vst [vmem:[%s3 + $0x1c] sm:$0xf] %v563
    %614 = vst [vmem:[%s3 + $0x20] sm:$0xf] %v564
    %615 = vst [vmem:[%s3 + $0x24] sm:$0xf] %v565
    %616 = vst [vmem:[%s3 + $0x28] sm:$0xf] %v566
    %617 = vst [vmem:[%s3 + $0x2c] sm:$0xf] %v567
    %618 = vst [vmem:[%s3 + $0x30] sm:$0xf] %v568
    %619 = vst [vmem:[%s3 + $0x34] sm:$0xf] %v569
    %620 = vst [vmem:[%s3 + $0x38] sm:$0xf] %v570
    %621 = vst [vmem:[%s3 + $0x3c] sm:$0xf] %v571
    %622 = vst [vmem:[%s3 + $0x40] sm:$0xf] %v572
    %623 = vst [vmem:[%s3 + $0x44] sm:$0xf] %v573
    %624 = vst [vmem:[%s3 + $0x48] sm:$0xf] %v574
    %625 = vst [vmem:[%s3 + $0x4c] sm:$0xf] %v575
    %626 = vst [vmem:[%s3 + $0x50] sm:$0xf] %v576
    %627 = vst [vmem:[%s3 + $0x54] sm:$0xf] %v577
    %628 = vst [vmem:[%s3 + $0x58] sm:$0xf] %v578
    %629 = vst [vmem:[%s3 + $0x5c] sm:$0xf] %v579
    %630 = vst [vmem:[%s3 + $0x60] sm:$0xf] %v580
  $region21: #{discriminator_forward.5} parent=0 // pred_fallthru
    _
  // Predicated region
  $region22: #{discriminator_forward.5} parent=0 // pred_check
    _
  $region23: #{discriminator_forward.5} parent=0 // pred_check_branch
    %632 = sbr.rel (0) target = $region25
  $region24: #{discriminator_forward.5} parent=0 // pred_region
    _
  $region25: #{discriminator_forward.5} parent=0 // pred_fallthru
    _
  // Predicated region
  $region26: #{discriminator_forward.5} parent=0 // pred_check
    _
  $region27: #{discriminator_forward.5} parent=0 // pred_check_branch
    %634 = sbr.rel (0) target = $region29
  $region28: #{discriminator_forward.5} parent=0 // pred_region
    _
  $region29: #{discriminator_forward.5} parent=0 // pred_fallthru
    _

// kernel: discriminator_forward.7
$region0: #{discriminator_forward.7}
  #allocation0 [shape = 'u32[]', space=smem, size = 0x4, offset = 0x4, fixed_abs, tag = 'smem constant byte address 0x4 - core index']
  #allocation1 [shape = 'u32[144,128]{1,0:T(1,128)}', space=vmem, size = 0x12000, scoped, tag = 'internal scratch']
  %s0 = inlined_call_operand.vmem [shape: bf16[32,128], index: 0, kind: input, shape index: {}]
  %s1 = inlined_call_operand.vmem [shape: f32[16,128], index: 1, kind: output, shape index: {}]
  %s2 = sld [smem:[#allocation0]]
  $region41: #{discriminator_forward.7} parent=0
    _
  %s4 = ssub.s32 1, %s2
  %s5 = scalar_select 0, %s4, %s2
  loop: start=0, step=1, limit=4
  $region2: #{discriminator_forward.7} parent=0 // loop_pre_header
    _
  $region3: #{discriminator_forward.7} parent=0 // loop_header
    %s7 = sphi 0, %s11
    %p8 = scmp.ge.s32.totalorder %s7, 4
    %s14 = sphi 0, %s26
    %s15 = sphi 0, %s22
    %s16 = sphi 0, %s14
    %s17 = sphi 0, %s15
    %s18 = sphi 0, %s16
    %s19 = sphi 0, %s17
    %s31 = sphi 0, %s33
    %s34 = sphi 0, %s31
    %s35 = sphi 0, %s34
    %s51 = sphi 0, %s35
    %s57 = sphi 0, %s59
    %s60 = sphi 0, %s57
    %s61 = sphi 0, %s60
    %s77 = sphi 0, %s61
  $region4: #{discriminator_forward.7} parent=0 // loop_header_branch
    %10 = sbr.rel (%p8) target = $region8
  $region5: #{discriminator_forward.7} parent=0 // loop_body
    %s12 = ssub.s32 %s7, 1
    %s13 = ssub.s32 %s7, 2
    %s20 = sadd.s32 1, %s15
    %p21 = scmp.ge.s32.totalorder %s20, 1
    %s22 = scalar_select %p21, 0, %s20
    %s23 = sadd.s32 1, %s14
    %s24 = scalar_select %p21, %s23, %s14
    %p25 = scmp.ge.s32.totalorder %s24, 2
    %s26 = scalar_select %p25, 0, %s24
    %s27 = sadd.s32 %s14, %s15
    %s28 = sadd.s32 %s26, %s22
    %s29 = ssub.s32 %s27, %s28
    %p30 = scmp.eq.s32.totalorder %s29, 0
    %s32 = sadd.s32 %s31, 1
    %s33 = scalar_select %p30, %s31, %s32
    %p36 = pneg %p30
    %p37 = scmp.eq.s32.totalorder %s7, 1
    %p38 = por %p36, %p37
    %p39 = scmp.ne.s32.totalorder %s31, %s34
    %p40 = scmp.eq.s32.totalorder %s7, 0
    %p41 = por %p39, %p40
    %p42 = scmp.ne.s32.totalorder %s31, %s34
    %p43 = scmp.eq.s32.totalorder %s12, 1
    %p44 = por %p42, %p43
    %p45 = scmp.ne.s32.totalorder %s34, %s35
    %p46 = scmp.eq.s32.totalorder %s12, 0
    %p47 = por %p45, %p46
    %p48 = scmp.ne.s32.totalorder %s34, %s35
    %p49 = scmp.eq.s32.totalorder %s13, 1
    %p50 = por %p48, %p49
    %p52 = scmp.ne.s32.totalorder %s35, %s51
    %p53 = scmp.eq.s32.totalorder %s13, 0
    %p54 = por %p52, %p53
    %s55 = ssub.s32 %s14, %s26
    %p56 = scmp.eq.s32.totalorder %s55, 0
    %s58 = sadd.s32 %s57, 1
    %s59 = scalar_select %p56, %s57, %s58
    %p62 = pneg %p56
    %p63 = scmp.eq.s32.totalorder %s7, 1
    %p64 = por %p62, %p63
    %p65 = scmp.ne.s32.totalorder %s57, %s60
    %p66 = scmp.eq.s32.totalorder %s7, 0
    %p67 = por %p65, %p66
    %p68 = scmp.ne.s32.totalorder %s57, %s60
    %p69 = scmp.eq.s32.totalorder %s12, 1
    %p70 = por %p68, %p69
    %p71 = scmp.ne.s32.totalorder %s60, %s61
    %p72 = scmp.eq.s32.totalorder %s12, 0
    %p73 = por %p71, %p72
    %p74 = scmp.ne.s32.totalorder %s60, %s61
    %p75 = scmp.eq.s32.totalorder %s13, 1
    %p76 = por %p74, %p75
    %p78 = scmp.ne.s32.totalorder %s61, %s77
    %p79 = scmp.eq.s32.totalorder %s13, 0
    %p80 = por %p78, %p79
    %p81 = scmp.le.s32.totalorder 1, %s7
    %p82 = scmp.lt.s32.totalorder %s7, 3
    %p83 = pnand %p81, %p82
    %p84 = pneg %p83
    // Predicated region
    $region9: #{discriminator_forward.7} parent=5 // pred_check
      _
    $region10: #{discriminator_forward.7} parent=5 // pred_check_branch
      %86 = sbr.rel (%p83) target = $region12
    $region11: #{discriminator_forward.7} parent=5 // pred_region
      %s87 = ssub.s32 %s7, 1
    $region12: #{discriminator_forward.7} parent=5 // pred_fallthru
      _
    %p88 = scmp.lt.s32.totalorder %s7, 2
    // Predicated region
    $region13: #{discriminator_forward.7} parent=5 // pred_check
      %p89 = pneg %p88
    $region14: #{discriminator_forward.7} parent=5 // pred_check_branch
      %91 = sbr.rel (%p89) target = $region16
    $region15: #{discriminator_forward.7} parent=5 // pred_region
      // Predicated region
      $region17: #{discriminator_forward.7} parent=15 // pred_check
        %p92 = pneg %p41
      $region18: #{discriminator_forward.7} parent=15 // pred_check_branch
        %94 = sbr.rel (%p92) target = $region20
      $region19: #{discriminator_forward.7} parent=15 // pred_region
        %s95 = sadd.s32 %s14, %s15
        %s96 = smul.u32 2, %s95
        %p97 = scmp.lt.s32.totalorder %s96, 3
        %s98 = scalar_select %p97, %s96, 3
        %s99 = smul.addr %s98, 4
        %s100 = scalar_lea.vmem %s0, %s99
        %s101 = sadd.s32 %s14, %s15
        %s102 = smul.u32 2, %s101
      $region20: #{discriminator_forward.7} parent=15 // pred_fallthru
        _
    $region16: #{discriminator_forward.7} parent=5 // pred_fallthru
      _
    %p103 = scmp.le.s32.totalorder 1, %s7
    %p104 = scmp.lt.s32.totalorder %s7, 3
    %p105 = pnand %p103, %p104
    %p106 = pneg %p105
    // Predicated region
    $region21: #{discriminator_forward.7} parent=5 // pred_check
      _
    $region22: #{discriminator_forward.7} parent=5 // pred_check_branch
      %108 = sbr.rel (%p105) target = $region24
    $region23: #{discriminator_forward.7} parent=5 // pred_region
      %s109 = ssub.s32 %s7, 1
      %s110 = sadd.s32 %s16, %s17
      %s111 = smul.u32 2, %s110
      %p112 = scmp.lt.s32.totalorder %s111, 3
      %s113 = scalar_select %p112, %s111, 3
      %s114 = smul.addr %s113, 4
      %s115 = scalar_lea.vmem %s0, %s114
      %p116 = pneg %p47
      %p117 = pneg %p44
      %p118 = pneg %p73
      %p119 = pneg %p70
      %p120 = scmp.lt.s32.totalorder %s16, 1
      %s121 = scalar_select %p120, %s16, 1
      %s122 = smul.addr %s121, 8
      %s123 = scalar_lea.vmem %s1, %s122
      %s124 = sadd.s32 %s16, %s17
      %s125 = smul.u32 2, %s124
      %p126 = scmp.lt.s32.totalorder %s125, 3
      %s127 = scalar_select %p126, %s125, 3
      %s128 = smul.addr %s127, 4
      %s129 = scalar_lea.vmem %s0, %s128
      %s130 = sadd.s32 %s16, %s17
      %s131 = smul.u32 2, %s130
      %p132 = scmp.lt.s32.totalorder %s16, 1
      %s133 = scalar_select %p132, %s16, 1
      %s134 = smul.addr %s133, 8
      %s135 = scalar_lea.vmem %s1, %s134
      %p136 = scmp.eq.s32.totalorder %s17, 0
      // Predicated region
      $region25: #{discriminator_forward.7} parent=23 // pred_check
        %p137 = pneg %p136
      $region26: #{discriminator_forward.7} parent=23 // pred_check_branch
        %139 = sbr.rel (%p137) target = $region28
      $region27: #{discriminator_forward.7} parent=23 // pred_region
        %140 = vst [vmem:[%s135] sm:$0xff] 0.0
      $region28: #{discriminator_forward.7} parent=23 // pred_fallthru
        _
      %v141 = vld [vmem:[%s129] sm:$0xf]
      %v142 = vld [vmem:[%s129 + $0x4] sm:$0xf]
      %v143 = vunpack.c.l.bf16 %v141
      %v144 = vunpack.c.l.bf16 %v142
      %v145 = vld [vmem:[%s135] sm:$0x1]
      %v146 = vadd.f32 %v143, %v144
      %v147 = vrot.slane %v146, 4
      %v148 = vadd.f32 %v146, %v147
      %v149 = vrot.slane %v148, 2
      %v150 = vadd.f32 %v148, %v149
      %v151 = vrot.slane %v150, 1
      %v152 = vadd.f32 %v150, %v151
      %v153 = vadd.f32 %v145, %v152
      %154 = vst [vmem:[%s135] sm:$0x1] %v153
      %v155 = vld [vmem:[%s135 + $0x1] sm:$0x1]
      %v156 = vmul.f32 %v143, %v143
      %v157 = vmul.f32 %v144, %v144
      %v158 = vadd.f32 %v156, %v157
      %v159 = vrot.slane %v158, 4
      %v160 = vadd.f32 %v158, %v159
      %v161 = vrot.slane %v160, 2
      %v162 = vadd.f32 %v160, %v161
      %v163 = vrot.slane %v162, 1
      %v164 = vadd.f32 %v162, %v163
      %v165 = vadd.f32 %v155, %v164
      %166 = vst [vmem:[%s135 + $0x1] sm:$0x1] %v165
      %p167 = scmp.lt.s32.totalorder %s16, 1
      %s168 = scalar_select %p167, %s16, 1
      %s169 = smul.addr %s168, 8
      %s170 = scalar_lea.vmem %s1, %s169
      // Predicated region
      $region29: #{discriminator_forward.7} parent=23 // pred_check
        %p171 = pneg %p70
      $region30: #{discriminator_forward.7} parent=23 // pred_check_branch
        %173 = sbr.rel (%p171) target = $region32
      $region31: #{discriminator_forward.7} parent=23 // pred_region
        _
      $region32: #{discriminator_forward.7} parent=23 // pred_fallthru
        _
    $region24: #{discriminator_forward.7} parent=5 // pred_fallthru
      _
    %p174 = scmp.le.s32.totalorder 2, %s7
    // Predicated region
    $region33: #{discriminator_forward.7} parent=5 // pred_check
      %p175 = pneg %p174
    $region34: #{discriminator_forward.7} parent=5 // pred_check_branch
      %177 = sbr.rel (%p175) target = $region36
    $region35: #{discriminator_forward.7} parent=5 // pred_region
      %s178 = ssub.s32 %s7, 2
      // Predicated region
      $region37: #{discriminator_forward.7} parent=35 // pred_check
        %p179 = pneg %p76
      $region38: #{discriminator_forward.7} parent=35 // pred_check_branch
        %181 = sbr.rel (%p179) target = $region40
      $region39: #{discriminator_forward.7} parent=35 // pred_region
        %p182 = scmp.lt.s32.totalorder %s18, 1
        %s183 = scalar_select %p182, %s18, 1
        %s184 = smul.addr %s183, 8
        %s185 = scalar_lea.vmem %s1, %s184
      $region40: #{discriminator_forward.7} parent=35 // pred_fallthru
        _
    $region36: #{discriminator_forward.7} parent=5 // pred_fallthru
      _
  $region6: #{discriminator_forward.7} parent=0 // loop_footer
    %s11 = sadd.s32 1, %s7
  $region7: #{discriminator_forward.7} parent=0 // loop_footer_branch
    %6 = sbr.rel target = $region3
  $region8: #{discriminator_forward.7} parent=0 // loop_exit
    _

// kernel: discriminator_forward.8
$region0: #{discriminator_forward.8}
  #allocation0 [shape = 'u32[]', space=smem, size = 0x4, offset = 0x4, fixed_abs, tag = 'smem constant byte address 0x4 - core index']
  #allocation1 [shape = 'u32[144,128]{1,0:T(1,128)}', space=vmem, size = 0x12000, scoped, tag = 'internal scratch']
  %s0 = inlined_call_operand.vmem [shape: bf16[32,128], index: 0, kind: input, shape index: {}]
  %s1 = inlined_call_operand.vmem [shape: f32[1,128], index: 1, kind: input, shape index: {}]
  %s2 = inlined_call_operand.vmem [shape: f32[1,128], index: 2, kind: input, shape index: {}]
  %s3 = inlined_call_operand.vmem [shape: bf16[32,128], index: 3, kind: output, shape index: {}]
  %s4 = sld [smem:[#allocation0]]
  $region45: #{discriminator_forward.8} parent=0
    _
  %s6 = ssub.s32 1, %s4
  %s7 = scalar_select 0, %s6, %s4
  loop: start=0, step=1, limit=4
  $region2: #{discriminator_forward.8} parent=0 // loop_pre_header
    _
  $region3: #{discriminator_forward.8} parent=0 // loop_header
    %s9 = sphi 0, %s13
    %p10 = scmp.ge.s32.totalorder %s9, 4
    %s19 = sphi 0, %s21
    %s22 = sphi 0, %s19
    %s23 = sphi 0, %s22
    %s39 = sphi 0, %s23
    %s43 = sphi 0, %s43
    %s45 = sphi 0, %s43
    %s46 = sphi 0, %s45
    %s60 = sphi 0, %s46
    %s64 = sphi 0, %s64
    %s66 = sphi 0, %s64
    %s67 = sphi 0, %s66
    %s81 = sphi 0, %s67
    %s87 = sphi 0, %s89
    %s90 = sphi 0, %s87
    %s91 = sphi 0, %s90
    %s107 = sphi 0, %s91
  $region4: #{discriminator_forward.8} parent=0 // loop_header_branch
    %12 = sbr.rel (%p10) target = $region8
  $region5: #{discriminator_forward.8} parent=0 // loop_body
    %s14 = ssub.s32 %s9, 1
    %s15 = ssub.s32 %s9, 2
    %s16 = sadd.s32 %s9, 1
    %s17 = ssub.s32 %s9, %s16
    %p18 = scmp.eq.s32.totalorder %s17, 0
    %s20 = sadd.s32 %s19, 1
    %s21 = scalar_select %p18, %s19, %s20
    %p24 = pneg %p18
    %p25 = scmp.eq.s32.totalorder %s9, 1
    %p26 = por %p24, %p25
    %p27 = scmp.ne.s32.totalorder %s19, %s22
    %p28 = scmp.eq.s32.totalorder %s9, 0
    %p29 = por %p27, %p28
    %p30 = scmp.ne.s32.totalorder %s19, %s22
    %p31 = scmp.eq.s32.totalorder %s14, 1
    %p32 = por %p30, %p31
    %p33 = scmp.ne.s32.totalorder %s22, %s23
    %p34 = scmp.eq.s32.totalorder %s14, 0
    %p35 = por %p33, %p34
    %p36 = scmp.ne.s32.totalorder %s22, %s23
    %p37 = scmp.eq.s32.totalorder %s15, 1
    %p38 = por %p36, %p37
    %p40 = scmp.ne.s32.totalorder %s23, %s39
    %p41 = scmp.eq.s32.totalorder %s15, 0
    %p42 = por %p40, %p41
    %s44 = sadd.s32 %s43, 1
    %p47 = scmp.eq.s32.totalorder %s9, 1
    %p48 = scmp.ne.s32.totalorder %s43, %s45
    %p49 = scmp.eq.s32.totalorder %s9, 0
    %p50 = por %p48, %p49
    %p51 = scmp.ne.s32.totalorder %s43, %s45
    %p52 = scmp.eq.s32.totalorder %s14, 1
    %p53 = por %p51, %p52
    %p54 = scmp.ne.s32.totalorder %s45, %s46
    %p55 = scmp.eq.s32.totalorder %s14, 0
    %p56 = por %p54, %p55
    %p57 = scmp.ne.s32.totalorder %s45, %s46
    %p58 = scmp.eq.s32.totalorder %s15, 1
    %p59 = por %p57, %p58
    %p61 = scmp.ne.s32.totalorder %s46, %s60
    %p62 = scmp.eq.s32.totalorder %s15, 0
    %p63 = por %p61, %p62
    %s65 = sadd.s32 %s64, 1
    %p68 = scmp.eq.s32.totalorder %s9, 1
    %p69 = scmp.ne.s32.totalorder %s64, %s66
    %p70 = scmp.eq.s32.totalorder %s9, 0
    %p71 = por %p69, %p70
    %p72 = scmp.ne.s32.totalorder %s64, %s66
    %p73 = scmp.eq.s32.totalorder %s14, 1
    %p74 = por %p72, %p73
    %p75 = scmp.ne.s32.totalorder %s66, %s67
    %p76 = scmp.eq.s32.totalorder %s14, 0
    %p77 = por %p75, %p76
    %p78 = scmp.ne.s32.totalorder %s66, %s67
    %p79 = scmp.eq.s32.totalorder %s15, 1
    %p80 = por %p78, %p79
    %p82 = scmp.ne.s32.totalorder %s67, %s81
    %p83 = scmp.eq.s32.totalorder %s15, 0
    %p84 = por %p82, %p83
    %s85 = ssub.s32 %s9, %s16
    %p86 = scmp.eq.s32.totalorder %s85, 0
    %s88 = sadd.s32 %s87, 1
    %s89 = scalar_select %p86, %s87, %s88
    %p92 = pneg %p86
    %p93 = scmp.eq.s32.totalorder %s9, 1
    %p94 = por %p92, %p93
    %p95 = scmp.ne.s32.totalorder %s87, %s90
    %p96 = scmp.eq.s32.totalorder %s9, 0
    %p97 = por %p95, %p96
    %p98 = scmp.ne.s32.totalorder %s87, %s90
    %p99 = scmp.eq.s32.totalorder %s14, 1
    %p100 = por %p98, %p99
    %p101 = scmp.ne.s32.totalorder %s90, %s91
    %p102 = scmp.eq.s32.totalorder %s14, 0
    %p103 = por %p101, %p102
    %p104 = scmp.ne.s32.totalorder %s90, %s91
    %p105 = scmp.eq.s32.totalorder %s15, 1
    %p106 = por %p104, %p105
    %p108 = scmp.ne.s32.totalorder %s91, %s107
    %p109 = scmp.eq.s32.totalorder %s15, 0
    %p110 = por %p108, %p109
    %p111 = scmp.le.s32.totalorder 1, %s9
    %p112 = scmp.lt.s32.totalorder %s9, 3
    %p113 = pnand %p111, %p112
    %p114 = pneg %p113
    // Predicated region
    $region9: #{discriminator_forward.8} parent=5 // pred_check
      _
    $region10: #{discriminator_forward.8} parent=5 // pred_check_branch
      %116 = sbr.rel (%p113) target = $region12
    $region11: #{discriminator_forward.8} parent=5 // pred_region
      %s117 = ssub.s32 %s9, 1
      // Predicated region
      $region13: #{discriminator_forward.8} parent=11 // pred_check
        %p118 = pneg %p56
      $region14: #{discriminator_forward.8} parent=11 // pred_check_branch
        %120 = sbr.rel (%p118) target = $region16
      $region15: #{discriminator_forward.8} parent=11 // pred_region
        _
      $region16: #{discriminator_forward.8} parent=11 // pred_fallthru
        _
      // Predicated region
      $region17: #{discriminator_forward.8} parent=11 // pred_check
        %p121 = pneg %p77
      $region18: #{discriminator_forward.8} parent=11 // pred_check_branch
        %123 = sbr.rel (%p121) target = $region20
      $region19: #{discriminator_forward.8} parent=11 // pred_region
        _
      $region20: #{discriminator_forward.8} parent=11 // pred_fallthru
        _
    $region12: #{discriminator_forward.8} parent=5 // pred_fallthru
      _
    %p124 = scmp.lt.s32.totalorder %s9, 2
    // Predicated region
    $region21: #{discriminator_forward.8} parent=5 // pred_check
      %p125 = pneg %p124
    $region22: #{discriminator_forward.8} parent=5 // pred_check_branch
      %127 = sbr.rel (%p125) target = $region24
    $region23: #{discriminator_forward.8} parent=5 // pred_region
      // Predicated region
      $region25: #{discriminator_forward.8} parent=23 // pred_check
        %p128 = pneg %p29
      $region26: #{discriminator_forward.8} parent=23 // pred_check_branch
        %130 = sbr.rel (%p128) target = $region28
      $region27: #{discriminator_forward.8} parent=23 // pred_region
        %s131 = smul.u32 2, %s9
        %p132 = scmp.lt.s32.totalorder %s131, 3
        %s133 = scalar_select %p132, %s131, 3
        %s134 = smul.addr %s133, 4
        %s135 = scalar_lea.vmem %s0, %s134
        %s136 = smul.u32 2, %s9
      $region28: #{discriminator_forward.8} parent=23 // pred_fallthru
        _
    $region24: #{discriminator_forward.8} parent=5 // pred_fallthru
      _
    %p137 = scmp.le.s32.totalorder 1, %s9
    %p138 = scmp.lt.s32.totalorder %s9, 3
    %p139 = pnand %p137, %p138
    %p140 = pneg %p139
    // Predicated region
    $region29: #{discriminator_forward.8} parent=5 // pred_check
      _
    $region30: #{discriminator_forward.8} parent=5 // pred_check_branch
      %142 = sbr.rel (%p139) target = $region32
    $region31: #{discriminator_forward.8} parent=5 // pred_region
      %s143 = ssub.s32 %s9, 1
      %s144 = smul.u32 2, %s14
      %p145 = scmp.lt.s32.totalorder %s144, 3
      %s146 = scalar_select %p145, %s144, 3
      %s147 = smul.addr %s146, 4
      %s148 = scalar_lea.vmem %s0, %s147
      %p149 = pneg %p35
      %p150 = pneg %p32
      %p151 = pneg %p56
      %p152 = pneg %p53
      %p153 = pneg %p77
      %p154 = pneg %p74
      %p155 = pneg %p103
      %p156 = pneg %p100
      %s157 = smul.u32 2, %s14
      %p158 = scmp.lt.s32.totalorder %s157, 3
      %s159 = scalar_select %p158, %s157, 3
      %s160 = smul.addr %s159, 4
      %s161 = scalar_lea.vmem %s3, %s160
      %s162 = smul.u32 2, %s14
      %p163 = scmp.lt.s32.totalorder %s162, 3
      %s164 = scalar_select %p163, %s162, 3
      %s165 = smul.addr %s164, 4
      %s166 = scalar_lea.vmem %s0, %s165
      %s167 = smul.u32 2, %s14
      %s168 = smul.u32 2, %s14
      %p169 = scmp.lt.s32.totalorder %s168, 3
      %s170 = scalar_select %p169, %s168, 3
      %s171 = smul.addr %s170, 4
      %s172 = scalar_lea.vmem %s3, %s171
      %s173 = smul.u32 2, %s14
      %v174 = vld [vmem:[%s166] sm:$0xf]
      %v175 = vld [vmem:[%s166 + $0x4] sm:$0xf]
      %v176 = vunpack.c.l.bf16 %v174
      %v177 = vunpack.c.l.bf16 %v175
      %v178 = vld [vmem:[%s1] sm:$0x1]
      %v180 = vlaneseq
      %v181 = vshrl.u32 %v180, 7
      %v182 = vsub.s32 0, %v181
      %v183 = vrot.slane %v178, %v182
      %v185 = vmul.f32 %v176, %v183
      %v186 = vmul.f32 %v177, %v183
      %v187 = vld [vmem:[%s2] sm:$0x1]
      %v189 = vlaneseq
      %v190 = vshrl.u32 %v189, 7
      %v191 = vsub.s32 0, %v190
      %v192 = vrot.slane %v187, %v191
      %v194 = vadd.f32 %v185, %v192
      %v195 = vadd.f32 %v186, %v192
      %v196 = vmax.f32 %v194, 0.0
      %v197 = vmax.f32 %v195, 0.0
      %v198 = vpack.c.bf16 %v197, %v196
      %v200 = vunpack.c.l.b16 %v198
      %v201 = vunpack.c.h.b16 %v198
      %v202 = vpack.c.b16 %v200, %v200
      %v203 = vpack.c.b16 %v201, %v201
      %206 = vst [vmem:[%s172] sm:$0xf] %v202
      %207 = vst [vmem:[%s172 + $0x4] sm:$0xf] %v203
      %s208 = smul.u32 2, %s14
      %p209 = scmp.lt.s32.totalorder %s208, 3
      %s210 = scalar_select %p209, %s208, 3
      %s211 = smul.addr %s210, 4
      %s212 = scalar_lea.vmem %s3, %s211
      // Predicated region
      $region33: #{discriminator_forward.8} parent=31 // pred_check
        %p213 = pneg %p100
      $region34: #{discriminator_forward.8} parent=31 // pred_check_branch
        %215 = sbr.rel (%p213) target = $region36
      $region35: #{discriminator_forward.8} parent=31 // pred_region
        %s216 = smul.u32 2, %s14
      $region36: #{discriminator_forward.8} parent=31 // pred_fallthru
        _
    $region32: #{discriminator_forward.8} parent=5 // pred_fallthru
      _
    %p217 = scmp.le.s32.totalorder 2, %s9
    // Predicated region
    $region37: #{discriminator_forward.8} parent=5 // pred_check
      %p218 = pneg %p217
    $region38: #{discriminator_forward.8} parent=5 // pred_check_branch
      %220 = sbr.rel (%p218) target = $region40
    $region39: #{discriminator_forward.8} parent=5 // pred_region
      %s221 = ssub.s32 %s9, 2
      // Predicated region
      $region41: #{discriminator_forward.8} parent=39 // pred_check
        %p222 = pneg %p106
      $region42: #{discriminator_forward.8} parent=39 // pred_check_branch
        %224 = sbr.rel (%p222) target = $region44
      $region43: #{discriminator_forward.8} parent=39 // pred_region
        %s225 = smul.u32 2, %s15
        %p226 = scmp.lt.s32.totalorder %s225, 3
        %s227 = scalar_select %p226, %s225, 3
        %s228 = smul.addr %s227, 4
        %s229 = scalar_lea.vmem %s3, %s228
      $region44: #{discriminator_forward.8} parent=39 // pred_fallthru
        _
    $region40: #{discriminator_forward.8} parent=5 // pred_fallthru
      _
  $region6: #{discriminator_forward.8} parent=0 // loop_footer
    %s13 = sadd.s32 1, %s9
  $region7: #{discriminator_forward.8} parent=0 // loop_footer_branch
    %8 = sbr.rel target = $region3
  $region8: #{discriminator_forward.8} parent=0 // loop_exit
    _

// kernel: discriminator_forward.6
$region0: #{discriminator_forward.6}
  #allocation0 [shape = 'u32[]', space=smem, size = 0x4, offset = 0x4, fixed_abs, tag = 'smem constant byte address 0x4 - core index']
  #allocation1 [shape = 'u32[144,128]{1,0:T(1,128)}', space=vmem, size = 0x12000, scoped, tag = 'internal scratch']
  #allocation2 [shape = 'f32[32,128]{1,0:T(8,128)}', space=vmem, size = 0x4000, scoped, tag = 'scratch operand']
  %s0 = inlined_call_operand.vmem [shape: bf16[32,1024], index: 0, kind: input, shape index: {}]
  %s1 = inlined_call_operand.vmem [shape: bf16[1024,128], index: 1, kind: input, shape index: {}]
  %s2 = inlined_call_operand.vmem [shape: bf16[32,128], index: 2, kind: output, shape index: {}]
  %s3 = sld [smem:[#allocation0]]
  $region26: #{discriminator_forward.6} parent=0
    _
  %s5 = ssub.s32 1, %s3
  %s6 = scalar_select 0, %s5, %s3
  // Predicated region
  $region2: #{discriminator_forward.6} parent=0 // pred_check
    _
  $region3: #{discriminator_forward.6} parent=0 // pred_check_branch
    %8 = sbr.rel (0) target = $region5
  $region4: #{discriminator_forward.6} parent=0 // pred_region
    _
  $region5: #{discriminator_forward.6} parent=0 // pred_fallthru
    _
  // Predicated region
  $region6: #{discriminator_forward.6} parent=0 // pred_check
    _
  $region7: #{discriminator_forward.6} parent=0 // pred_check_branch
    %10 = sbr.rel (0) target = $region9
  $region8: #{discriminator_forward.6} parent=0 // pred_region
    _
  $region9: #{discriminator_forward.6} parent=0 // pred_fallthru
    _
  %p12 = scmp.eq.s32.totalorder 0, 0
  // Predicated region
  $region10: #{discriminator_forward.6} parent=0 // pred_check
    %p13 = pneg %p12
  $region11: #{discriminator_forward.6} parent=0 // pred_check_branch
    %15 = sbr.rel (%p13) target = $region13
  $region12: #{discriminator_forward.6} parent=0 // pred_region
    %16 = vst [vmem:[#allocation2] sm:$0xff] 0.0
    %17 = vst [vmem:[#allocation2 + $0x8] sm:$0xff] 0.0
    %18 = vst [vmem:[#allocation2 + $0x10] sm:$0xff] 0.0
    %19 = vst [vmem:[#allocation2 + $0x18] sm:$0xff] 0.0
  $region13: #{discriminator_forward.6} parent=0 // pred_fallthru
    _
  %v20 = vld [vmem:[#allocation2] sm:$0xff]
  %v21 = vld [vmem:[#allocation2 + $0x8] sm:$0xff]
  %v22 = vld [vmem:[#allocation2 + $0x10] sm:$0xff]
  %v23 = vld [vmem:[#allocation2 + $0x18] sm:$0xff]
  %v24 = vld [vmem:[%s0] sm:$0xff]
  %v25 = vld [vmem:[%s0 + $0x8] sm:$0xff]
  %v26 = vld [vmem:[%s0 + $0x10] sm:$0xff]
  %v27 = vld [vmem:[%s0 + $0x18] sm:$0xff]
  %v28 = vld [vmem:[%s0 + $0x20] sm:$0xff]
  %v29 = vld [vmem:[%s0 + $0x28] sm:$0xff]
  %v30 = vld [vmem:[%s0 + $0x30] sm:$0xff]
  %v31 = vld [vmem:[%s0 + $0x38] sm:$0xff]
  %v32 = vld [vmem:[%s0 + $0x40] sm:$0xff]
  %v33 = vld [vmem:[%s0 + $0x48] sm:$0xff]
  %v34 = vld [vmem:[%s0 + $0x50] sm:$0xff]
  %v35 = vld [vmem:[%s0 + $0x58] sm:$0xff]
  %v36 = vld [vmem:[%s0 + $0x60] sm:$0xff]
  %v37 = vld [vmem:[%s0 + $0x68] sm:$0xff]
  %v38 = vld [vmem:[%s0 + $0x70] sm:$0xff]
  %v39 = vld [vmem:[%s0 + $0x78] sm:$0xff]
  %v40 = vld [vmem:[%s1] sm:$0xf]
  %v41 = vld [vmem:[%s1 + $0x4] sm:$0xf]
  %v42 = vld [vmem:[%s1 + $0x8] sm:$0xf]
  %v43 = vld [vmem:[%s1 + $0xc] sm:$0xf]
  %v44 = vld [vmem:[%s1 + $0x10] sm:$0xf]
  %v45 = vld [vmem:[%s1 + $0x14] sm:$0xf]
  %v46 = vld [vmem:[%s1 + $0x18] sm:$0xf]
  %v47 = vld [vmem:[%s1 + $0x1c] sm:$0xf]
  %v48 = vld [vmem:[%s1 + $0x20] sm:$0xf]
  %v49 = vld [vmem:[%s1 + $0x24] sm:$0xf]
  %v50 = vld [vmem:[%s1 + $0x28] sm:$0xf]
  %v51 = vld [vmem:[%s1 + $0x2c] sm:$0xf]
  %v52 = vld [vmem:[%s1 + $0x30] sm:$0xf]
  %v53 = vld [vmem:[%s1 + $0x34] sm:$0xf]
  %v54 = vld [vmem:[%s1 + $0x38] sm:$0xf]
  %v55 = vld [vmem:[%s1 + $0x3c] sm:$0xf]
  %v56 = vld [vmem:[%s1 + $0x40] sm:$0xf]
  %v57 = vld [vmem:[%s1 + $0x44] sm:$0xf]
  %v58 = vld [vmem:[%s1 + $0x48] sm:$0xf]
  %v59 = vld [vmem:[%s1 + $0x4c] sm:$0xf]
  %v60 = vld [vmem:[%s1 + $0x50] sm:$0xf]
  %v61 = vld [vmem:[%s1 + $0x54] sm:$0xf]
  %v62 = vld [vmem:[%s1 + $0x58] sm:$0xf]
  %v63 = vld [vmem:[%s1 + $0x5c] sm:$0xf]
  %v64 = vld [vmem:[%s1 + $0x60] sm:$0xf]
  %v65 = vld [vmem:[%s1 + $0x64] sm:$0xf]
  %v66 = vld [vmem:[%s1 + $0x68] sm:$0xf]
  %v67 = vld [vmem:[%s1 + $0x6c] sm:$0xf]
  %v68 = vld [vmem:[%s1 + $0x70] sm:$0xf]
  %v69 = vld [vmem:[%s1 + $0x74] sm:$0xf]
  %v70 = vld [vmem:[%s1 + $0x78] sm:$0xf]
  %v71 = vld [vmem:[%s1 + $0x7c] sm:$0xf]
  %v72 = vld [vmem:[%s1 + $0x80] sm:$0xf]
  %v73 = vld [vmem:[%s1 + $0x84] sm:$0xf]
  %v74 = vld [vmem:[%s1 + $0x88] sm:$0xf]
  %v75 = vld [vmem:[%s1 + $0x8c] sm:$0xf]
  %v76 = vld [vmem:[%s1 + $0x90] sm:$0xf]
  %v77 = vld [vmem:[%s1 + $0x94] sm:$0xf]
  %v78 = vld [vmem:[%s1 + $0x98] sm:$0xf]
  %v79 = vld [vmem:[%s1 + $0x9c] sm:$0xf]
  %v80 = vld [vmem:[%s1 + $0xa0] sm:$0xf]
  %v81 = vld [vmem:[%s1 + $0xa4] sm:$0xf]
  %v82 = vld [vmem:[%s1 + $0xa8] sm:$0xf]
  %v83 = vld [vmem:[%s1 + $0xac] sm:$0xf]
  %v84 = vld [vmem:[%s1 + $0xb0] sm:$0xf]
  %v85 = vld [vmem:[%s1 + $0xb4] sm:$0xf]
  %v86 = vld [vmem:[%s1 + $0xb8] sm:$0xf]
  %v87 = vld [vmem:[%s1 + $0xbc] sm:$0xf]
  %v88 = vld [vmem:[%s1 + $0xc0] sm:$0xf]
  %v89 = vld [vmem:[%s1 + $0xc4] sm:$0xf]
  %v90 = vld [vmem:[%s1 + $0xc8] sm:$0xf]
  %v91 = vld [vmem:[%s1 + $0xcc] sm:$0xf]
  %v92 = vld [vmem:[%s1 + $0xd0] sm:$0xf]
  %v93 = vld [vmem:[%s1 + $0xd4] sm:$0xf]
  %v94 = vld [vmem:[%s1 + $0xd8] sm:$0xf]
  %v95 = vld [vmem:[%s1 + $0xdc] sm:$0xf]
  %v96 = vld [vmem:[%s1 + $0xe0] sm:$0xf]
  %v97 = vld [vmem:[%s1 + $0xe4] sm:$0xf]
  %v98 = vld [vmem:[%s1 + $0xe8] sm:$0xf]
  %v99 = vld [vmem:[%s1 + $0xec] sm:$0xf]
  %v100 = vld [vmem:[%s1 + $0xf0] sm:$0xf]
  %v101 = vld [vmem:[%s1 + $0xf4] sm:$0xf]
  %v102 = vld [vmem:[%s1 + $0xf8] sm:$0xf]
  %v103 = vld [vmem:[%s1 + $0xfc] sm:$0xf]
  %v104 = vld [vmem:[%s1 + $0x100] sm:$0xf]
  %v105 = vld [vmem:[%s1 + $0x104] sm:$0xf]
  %v106 = vld [vmem:[%s1 + $0x108] sm:$0xf]
  %v107 = vld [vmem:[%s1 + $0x10c] sm:$0xf]
  %v108 = vld [vmem:[%s1 + $0x110] sm:$0xf]
  %v109 = vld [vmem:[%s1 + $0x114] sm:$0xf]
  %v110 = vld [vmem:[%s1 + $0x118] sm:$0xf]
  %v111 = vld [vmem:[%s1 + $0x11c] sm:$0xf]
  %v112 = vld [vmem:[%s1 + $0x120] sm:$0xf]
  %v113 = vld [vmem:[%s1 + $0x124] sm:$0xf]
  %v114 = vld [vmem:[%s1 + $0x128] sm:$0xf]
  %v115 = vld [vmem:[%s1 + $0x12c] sm:$0xf]
  %v116 = vld [vmem:[%s1 + $0x130] sm:$0xf]
  %v117 = vld [vmem:[%s1 + $0x134] sm:$0xf]
  %v118 = vld [vmem:[%s1 + $0x138] sm:$0xf]
  %v119 = vld [vmem:[%s1 + $0x13c] sm:$0xf]
  %v120 = vld [vmem:[%s1 + $0x140] sm:$0xf]
  %v121 = vld [vmem:[%s1 + $0x144] sm:$0xf]
  %v122 = vld [vmem:[%s1 + $0x148] sm:$0xf]
  %v123 = vld [vmem:[%s1 + $0x14c] sm:$0xf]
  %v124 = vld [vmem:[%s1 + $0x150] sm:$0xf]
  %v125 = vld [vmem:[%s1 + $0x154] sm:$0xf]
  %v126 = vld [vmem:[%s1 + $0x158] sm:$0xf]
  %v127 = vld [vmem:[%s1 + $0x15c] sm:$0xf]
  %v128 = vld [vmem:[%s1 + $0x160] sm:$0xf]
  %v129 = vld [vmem:[%s1 + $0x164] sm:$0xf]
  %v130 = vld [vmem:[%s1 + $0x168] sm:$0xf]
  %v131 = vld [vmem:[%s1 + $0x16c] sm:$0xf]
  %v132 = vld [vmem:[%s1 + $0x170] sm:$0xf]
  %v133 = vld [vmem:[%s1 + $0x174] sm:$0xf]
  %v134 = vld [vmem:[%s1 + $0x178] sm:$0xf]
  %v135 = vld [vmem:[%s1 + $0x17c] sm:$0xf]
  %v136 = vld [vmem:[%s1 + $0x180] sm:$0xf]
  %v137 = vld [vmem:[%s1 + $0x184] sm:$0xf]
  %v138 = vld [vmem:[%s1 + $0x188] sm:$0xf]
  %v139 = vld [vmem:[%s1 + $0x18c] sm:$0xf]
  %v140 = vld [vmem:[%s1 + $0x190] sm:$0xf]
  %v141 = vld [vmem:[%s1 + $0x194] sm:$0xf]
  %v142 = vld [vmem:[%s1 + $0x198] sm:$0xf]
  %v143 = vld [vmem:[%s1 + $0x19c] sm:$0xf]
  %v144 = vld [vmem:[%s1 + $0x1a0] sm:$0xf]
  %v145 = vld [vmem:[%s1 + $0x1a4] sm:$0xf]
  %v146 = vld [vmem:[%s1 + $0x1a8] sm:$0xf]
  %v147 = vld [vmem:[%s1 + $0x1ac] sm:$0xf]
  %v148 = vld [vmem:[%s1 + $0x1b0] sm:$0xf]
  %v149 = vld [vmem:[%s1 + $0x1b4] sm:$0xf]
  %v150 = vld [vmem:[%s1 + $0x1b8] sm:$0xf]
  %v151 = vld [vmem:[%s1 + $0x1bc] sm:$0xf]
  %v152 = vld [vmem:[%s1 + $0x1c0] sm:$0xf]
  %v153 = vld [vmem:[%s1 + $0x1c4] sm:$0xf]
  %v154 = vld [vmem:[%s1 + $0x1c8] sm:$0xf]
  %v155 = vld [vmem:[%s1 + $0x1cc] sm:$0xf]
  %v156 = vld [vmem:[%s1 + $0x1d0] sm:$0xf]
  %v157 = vld [vmem:[%s1 + $0x1d4] sm:$0xf]
  %v158 = vld [vmem:[%s1 + $0x1d8] sm:$0xf]
  %v159 = vld [vmem:[%s1 + $0x1dc] sm:$0xf]
  %v160 = vld [vmem:[%s1 + $0x1e0] sm:$0xf]
  %v161 = vld [vmem:[%s1 + $0x1e4] sm:$0xf]
  %v162 = vld [vmem:[%s1 + $0x1e8] sm:$0xf]
  %v163 = vld [vmem:[%s1 + $0x1ec] sm:$0xf]
  %v164 = vld [vmem:[%s1 + $0x1f0] sm:$0xf]
  %v165 = vld [vmem:[%s1 + $0x1f4] sm:$0xf]
  %v166 = vld [vmem:[%s1 + $0x1f8] sm:$0xf]
  %v167 = vld [vmem:[%s1 + $0x1fc] sm:$0xf]
  %v184 = vunpack.c.l.b16 %v24
  %v185 = vunpack.c.h.b16 %v24
  %v186 = vunpack.c.l.b16 %v25
  %v187 = vunpack.c.h.b16 %v25
  %v188 = vunpack.c.l.b16 %v26
  %v189 = vunpack.c.h.b16 %v26
  %v190 = vunpack.c.l.b16 %v27
  %v191 = vunpack.c.h.b16 %v27
  %v192 = vunpack.c.l.b16 %v28
  %v193 = vunpack.c.h.b16 %v28
  %v194 = vunpack.c.l.b16 %v29
  %v195 = vunpack.c.h.b16 %v29
  %v196 = vunpack.c.l.b16 %v30
  %v197 = vunpack.c.h.b16 %v30
  %v198 = vunpack.c.l.b16 %v31
  %v199 = vunpack.c.h.b16 %v31
  %v200 = vunpack.c.l.b16 %v32
  %v201 = vunpack.c.h.b16 %v32
  %v202 = vunpack.c.l.b16 %v33
  %v203 = vunpack.c.h.b16 %v33
  %v204 = vunpack.c.l.b16 %v34
  %v205 = vunpack.c.h.b16 %v34
  %v206 = vunpack.c.l.b16 %v35
  %v207 = vunpack.c.h.b16 %v35
  %v208 = vunpack.c.l.b16 %v36
  %v209 = vunpack.c.h.b16 %v36
  %v210 = vunpack.c.l.b16 %v37
  %v211 = vunpack.c.h.b16 %v37
  %v212 = vunpack.c.l.b16 %v38
  %v213 = vunpack.c.h.b16 %v38
  %v214 = vunpack.c.l.b16 %v39
  %v215 = vunpack.c.h.b16 %v39
  %v216 = vpack.c.b16 %v192, %v184
  %v217 = vpack.c.b16 %v193, %v185
  %v218 = vpack.c.b16 %v194, %v186
  %v219 = vpack.c.b16 %v195, %v187
  %v220 = vpack.c.b16 %v196, %v188
  %v221 = vpack.c.b16 %v197, %v189
  %v222 = vpack.c.b16 %v198, %v190
  %v223 = vpack.c.b16 %v199, %v191
  %v224 = vpack.c.b16 %v208, %v200
  %v225 = vpack.c.b16 %v209, %v201
  %v226 = vpack.c.b16 %v210, %v202
  %v227 = vpack.c.b16 %v211, %v203
  %v228 = vpack.c.b16 %v212, %v204
  %v229 = vpack.c.b16 %v213, %v205
  %v230 = vpack.c.b16 %v214, %v206
  %v231 = vpack.c.b16 %v215, %v207
  %v376 = vunpack.c.l.b16 %v40
  %v377 = vunpack.c.l.b16 %v41
  %v378 = vunpack.c.l.b16 %v42
  %v379 = vunpack.c.l.b16 %v43
  %v380 = vunpack.c.l.b16 %v44
  %v381 = vunpack.c.l.b16 %v45
  %v382 = vunpack.c.l.b16 %v46
  %v383 = vunpack.c.l.b16 %v47
  %v384 = vunpack.c.l.b16 %v48
  %v385 = vunpack.c.l.b16 %v49
  %v386 = vunpack.c.l.b16 %v50
  %v387 = vunpack.c.l.b16 %v51
  %v388 = vunpack.c.l.b16 %v52
  %v389 = vunpack.c.l.b16 %v53
  %v390 = vunpack.c.l.b16 %v54
  %v391 = vunpack.c.l.b16 %v55
  %v392 = vunpack.c.l.b16 %v56
  %v393 = vunpack.c.l.b16 %v57
  %v394 = vunpack.c.l.b16 %v58
  %v395 = vunpack.c.l.b16 %v59
  %v396 = vunpack.c.l.b16 %v60
  %v397 = vunpack.c.l.b16 %v61
  %v398 = vunpack.c.l.b16 %v62
  %v399 = vunpack.c.l.b16 %v63
  %v400 = vunpack.c.l.b16 %v64
  %v401 = vunpack.c.l.b16 %v65
  %v402 = vunpack.c.l.b16 %v66
  %v403 = vunpack.c.l.b16 %v67
  %v404 = vunpack.c.l.b16 %v68
  %v405 = vunpack.c.l.b16 %v69
  %v406 = vunpack.c.l.b16 %v70
  %v407 = vunpack.c.l.b16 %v71
  %v408 = vunpack.c.l.b16 %v72
  %v409 = vunpack.c.l.b16 %v73
  %v410 = vunpack.c.l.b16 %v74
  %v411 = vunpack.c.l.b16 %v75
  %v412 = vunpack.c.l.b16 %v76
  %v413 = vunpack.c.l.b16 %v77
  %v414 = vunpack.c.l.b16 %v78
  %v415 = vunpack.c.l.b16 %v79
  %v416 = vunpack.c.l.b16 %v80
  %v417 = vunpack.c.l.b16 %v81
  %v418 = vunpack.c.l.b16 %v82
  %v419 = vunpack.c.l.b16 %v83
  %v420 = vunpack.c.l.b16 %v84
  %v421 = vunpack.c.l.b16 %v85
  %v422 = vunpack.c.l.b16 %v86
  %v423 = vunpack.c.l.b16 %v87
  %v424 = vunpack.c.l.b16 %v88
  %v425 = vunpack.c.l.b16 %v89
  %v426 = vunpack.c.l.b16 %v90
  %v427 = vunpack.c.l.b16 %v91
  %v428 = vunpack.c.l.b16 %v92
  %v429 = vunpack.c.l.b16 %v93
  %v430 = vunpack.c.l.b16 %v94
  %v431 = vunpack.c.l.b16 %v95
  %v432 = vunpack.c.l.b16 %v96
  %v433 = vunpack.c.l.b16 %v97
  %v434 = vunpack.c.l.b16 %v98
  %v435 = vunpack.c.l.b16 %v99
  %v436 = vunpack.c.l.b16 %v100
  %v437 = vunpack.c.l.b16 %v101
  %v438 = vunpack.c.l.b16 %v102
  %v439 = vunpack.c.l.b16 %v103
  %v440 = vunpack.c.l.b16 %v104
  %v441 = vunpack.c.l.b16 %v105
  %v442 = vunpack.c.l.b16 %v106
  %v443 = vunpack.c.l.b16 %v107
  %v444 = vunpack.c.l.b16 %v108
  %v445 = vunpack.c.l.b16 %v109
  %v446 = vunpack.c.l.b16 %v110
  %v447 = vunpack.c.l.b16 %v111
  %v448 = vunpack.c.l.b16 %v112
  %v449 = vunpack.c.l.b16 %v113
  %v450 = vunpack.c.l.b16 %v114
  %v451 = vunpack.c.l.b16 %v115
  %v452 = vunpack.c.l.b16 %v116
  %v453 = vunpack.c.l.b16 %v117
  %v454 = vunpack.c.l.b16 %v118
  %v455 = vunpack.c.l.b16 %v119
  %v456 = vunpack.c.l.b16 %v120
  %v457 = vunpack.c.l.b16 %v121
  %v458 = vunpack.c.l.b16 %v122
  %v459 = vunpack.c.l.b16 %v123
  %v460 = vunpack.c.l.b16 %v124
  %v461 = vunpack.c.l.b16 %v125
  %v462 = vunpack.c.l.b16 %v126
  %v463 = vunpack.c.l.b16 %v127
  %v464 = vunpack.c.l.b16 %v128
  %v465 = vunpack.c.l.b16 %v129
  %v466 = vunpack.c.l.b16 %v130
  %v467 = vunpack.c.l.b16 %v131
  %v468 = vunpack.c.l.b16 %v132
  %v469 = vunpack.c.l.b16 %v133
  %v470 = vunpack.c.l.b16 %v134
  %v471 = vunpack.c.l.b16 %v135
  %v472 = vunpack.c.l.b16 %v136
  %v473 = vunpack.c.l.b16 %v137
  %v474 = vunpack.c.l.b16 %v138
  %v475 = vunpack.c.l.b16 %v139
  %v476 = vunpack.c.l.b16 %v140
  %v477 = vunpack.c.l.b16 %v141
  %v478 = vunpack.c.l.b16 %v142
  %v479 = vunpack.c.l.b16 %v143
  %v480 = vunpack.c.l.b16 %v144
  %v481 = vunpack.c.l.b16 %v145
  %v482 = vunpack.c.l.b16 %v146
  %v483 = vunpack.c.l.b16 %v147
  %v484 = vunpack.c.l.b16 %v148
  %v485 = vunpack.c.l.b16 %v149
  %v486 = vunpack.c.l.b16 %v150
  %v487 = vunpack.c.l.b16 %v151
  %v488 = vunpack.c.l.b16 %v152
  %v489 = vunpack.c.l.b16 %v153
  %v490 = vunpack.c.l.b16 %v154
  %v491 = vunpack.c.l.b16 %v155
  %v492 = vunpack.c.l.b16 %v156
  %v493 = vunpack.c.l.b16 %v157
  %v494 = vunpack.c.l.b16 %v158
  %v495 = vunpack.c.l.b16 %v159
  %v496 = vunpack.c.l.b16 %v160
  %v497 = vunpack.c.l.b16 %v161
  %v498 = vunpack.c.l.b16 %v162
  %v499 = vunpack.c.l.b16 %v163
  %v500 = vunpack.c.l.b16 %v164
  %v501 = vunpack.c.l.b16 %v165
  %v502 = vunpack.c.l.b16 %v166
  %v503 = vunpack.c.l.b16 %v167
  %v504 = vpack.c.b16 %v377, %v376
  %v505 = vpack.c.b16 %v379, %v378
  %v506 = vpack.c.b16 %v381, %v380
  %v507 = vpack.c.b16 %v383, %v382
  %v508 = vpack.c.b16 %v385, %v384
  %v509 = vpack.c.b16 %v387, %v386
  %v510 = vpack.c.b16 %v389, %v388
  %v511 = vpack.c.b16 %v391, %v390
  %v512 = vpack.c.b16 %v393, %v392
  %v513 = vpack.c.b16 %v395, %v394
  %v514 = vpack.c.b16 %v397, %v396
  %v515 = vpack.c.b16 %v399, %v398
  %v516 = vpack.c.b16 %v401, %v400
  %v517 = vpack.c.b16 %v403, %v402
  %v518 = vpack.c.b16 %v405, %v404
  %v519 = vpack.c.b16 %v407, %v406
  %v520 = vpack.c.b16 %v409, %v408
  %v521 = vpack.c.b16 %v411, %v410
  %v522 = vpack.c.b16 %v413, %v412
  %v523 = vpack.c.b16 %v415, %v414
  %v524 = vpack.c.b16 %v417, %v416
  %v525 = vpack.c.b16 %v419, %v418
  %v526 = vpack.c.b16 %v421, %v420
  %v527 = vpack.c.b16 %v423, %v422
  %v528 = vpack.c.b16 %v425, %v424
  %v529 = vpack.c.b16 %v427, %v426
  %v530 = vpack.c.b16 %v429, %v428
  %v531 = vpack.c.b16 %v431, %v430
  %v532 = vpack.c.b16 %v433, %v432
  %v533 = vpack.c.b16 %v435, %v434
  %v534 = vpack.c.b16 %v437, %v436
  %v535 = vpack.c.b16 %v439, %v438
  %v536 = vpack.c.b16 %v441, %v440
  %v537 = vpack.c.b16 %v443, %v442
  %v538 = vpack.c.b16 %v445, %v444
  %v539 = vpack.c.b16 %v447, %v446
  %v540 = vpack.c.b16 %v449, %v448
  %v541 = vpack.c.b16 %v451, %v450
  %v542 = vpack.c.b16 %v453, %v452
  %v543 = vpack.c.b16 %v455, %v454
  %v544 = vpack.c.b16 %v457, %v456
  %v545 = vpack.c.b16 %v459, %v458
  %v546 = vpack.c.b16 %v461, %v460
  %v547 = vpack.c.b16 %v463, %v462
  %v548 = vpack.c.b16 %v465, %v464
  %v549 = vpack.c.b16 %v467, %v466
  %v550 = vpack.c.b16 %v469, %v468
  %v551 = vpack.c.b16 %v471, %v470
  %v552 = vpack.c.b16 %v473, %v472
  %v553 = vpack.c.b16 %v475, %v474
  %v554 = vpack.c.b16 %v477, %v476
  %v555 = vpack.c.b16 %v479, %v478
  %v556 = vpack.c.b16 %v481, %v480
  %v557 = vpack.c.b16 %v483, %v482
  %v558 = vpack.c.b16 %v485, %v484
  %v559 = vpack.c.b16 %v487, %v486
  %v560 = vpack.c.b16 %v489, %v488
  %v561 = vpack.c.b16 %v491, %v490
  %v562 = vpack.c.b16 %v493, %v492
  %v563 = vpack.c.b16 %v495, %v494
  %v564 = vpack.c.b16 %v497, %v496
  %v565 = vpack.c.b16 %v499, %v498
  %v566 = vpack.c.b16 %v501, %v500
  %v567 = vpack.c.b16 %v503, %v502
  %632 = vmatprep.subr.bf16.mxu0 0
  %633 = vmatpush1.bf16.msra.mxu0 %v511
  %634 = vmatprep.subr.bf16.mxu0 0
  %635 = vmatpush1.bf16.msra.mxu0 %v510
  %636 = vmatprep.subr.bf16.mxu0 0
  %637 = vmatpush1.bf16.msra.mxu0 %v509
  %638 = vmatprep.subr.bf16.mxu0 0
  %639 = vmatpush1.bf16.msra.mxu0 %v508
  %640 = vmatprep.subr.bf16.mxu0 0
  %641 = vmatpush1.bf16.msra.mxu0 %v507
  %642 = vmatprep.subr.bf16.mxu0 0
  %643 = vmatpush1.bf16.msra.mxu0 %v506
  %644 = vmatprep.subr.bf16.mxu0 0
  %645 = vmatpush1.bf16.msra.mxu0 %v505
  %646 = vmatprep.subr.bf16.mxu0 0
  %647 = vmatpush1.bf16.msra.mxu0 %v504
  %648 = vmatprep.subr.bf16.mxu0 0
  %649 = vmatpush2.bf16.msra.mxu0 %v519
  %650 = vmatprep.subr.bf16.mxu0 0
  %651 = vmatpush2.bf16.msra.mxu0 %v518
  %652 = vmatprep.subr.bf16.mxu0 0
  %653 = vmatpush2.bf16.msra.mxu0 %v517
  %654 = vmatprep.subr.bf16.mxu0 0
  %655 = vmatpush2.bf16.msra.mxu0 %v516
  %656 = vmatprep.subr.bf16.mxu0 0
  %657 = vmatpush2.bf16.msra.mxu0 %v515
  %658 = vmatprep.subr.bf16.mxu0 0
  %659 = vmatpush2.bf16.msra.mxu0 %v514
  %660 = vmatprep.subr.bf16.mxu0 0
  %661 = vmatpush2.bf16.msra.mxu0 %v513
  %662 = vmatprep.subr.bf16.mxu0 0
  %663 = vmatpush2.bf16.msra.mxu0 %v512
  %664 = vmatprep.mubr.bf16.mxu0 %v217
  %665 = vmatmul.mubr.bf16.gmra.mxu0 %v216
  %v666 = vpop.f32.mrf.mxu0
  %v667 = vadd.f32 0.0, %v666
  %v668 = vpop.f32.mrf.mxu0
  %v669 = vpop.f32.mrf.mxu0
  %v670 = vadd.f32 0.0, %v669
  %v671 = vpop.f32.mrf.mxu0
  %672 = vmatprep.mubr.bf16.mxu0 %v225
  %673 = vmatmul.mubr.bf16.gmra.mxu0 %v224
  %v674 = vpop.f32.mrf.mxu0
  %v675 = vadd.f32 0.0, %v674
  %v676 = vpop.f32.mrf.mxu0
  %v677 = vpop.f32.mrf.mxu0
  %v678 = vadd.f32 0.0, %v677
  %v679 = vpop.f32.mrf.mxu0
  %680 = vdwg.mxu0
  %681 = vmatprep.subr.bf16.mxu0 0
  %682 = vmatpush1.bf16.msra.mxu0 %v527
  %683 = vmatprep.subr.bf16.mxu0 0
  %684 = vmatpush1.bf16.msra.mxu0 %v526
  %685 = vmatprep.subr.bf16.mxu0 0
  %686 = vmatpush1.bf16.msra.mxu0 %v525
  %687 = vmatprep.subr.bf16.mxu0 0
  %688 = vmatpush1.bf16.msra.mxu0 %v524
  %689 = vmatprep.subr.bf16.mxu0 0
  %690 = vmatpush1.bf16.msra.mxu0 %v523
  %691 = vmatprep.subr.bf16.mxu0 0
  %692 = vmatpush1.bf16.msra.mxu0 %v522
  %693 = vmatprep.subr.bf16.mxu0 0
  %694 = vmatpush1.bf16.msra.mxu0 %v521
  %695 = vmatprep.subr.bf16.mxu0 0
  %696 = vmatpush1.bf16.msra.mxu0 %v520
  %697 = vmatprep.subr.bf16.mxu0 0
  %698 = vmatpush2.bf16.msra.mxu0 %v535
  %699 = vmatprep.subr.bf16.mxu0 0
  %700 = vmatpush2.bf16.msra.mxu0 %v534
  %701 = vmatprep.subr.bf16.mxu0 0
  %702 = vmatpush2.bf16.msra.mxu0 %v533
  %703 = vmatprep.subr.bf16.mxu0 0
  %704 = vmatpush2.bf16.msra.mxu0 %v532
  %705 = vmatprep.subr.bf16.mxu0 0
  %706 = vmatpush2.bf16.msra.mxu0 %v531
  %707 = vmatprep.subr.bf16.mxu0 0
  %708 = vmatpush2.bf16.msra.mxu0 %v530
  %709 = vmatprep.subr.bf16.mxu0 0
  %710 = vmatpush2.bf16.msra.mxu0 %v529
  %711 = vmatprep.subr.bf16.mxu0 0
  %712 = vmatpush2.bf16.msra.mxu0 %v528
  %713 = vmatprep.mubr.bf16.mxu0 %v219
  %714 = vmatmul.mubr.bf16.gmra.mxu0 %v218
  %v715 = vpop.f32.mrf.mxu0
  %v716 = vadd.f32 %v667, %v715
  %v717 = vpop.f32.mrf.mxu0
  %v718 = vpop.f32.mrf.mxu0
  %v719 = vadd.f32 %v670, %v718
  %v720 = vpop.f32.mrf.mxu0
  %721 = vmatprep.mubr.bf16.mxu0 %v227
  %722 = vmatmul.mubr.bf16.gmra.mxu0 %v226
  %v723 = vpop.f32.mrf.mxu0
  %v724 = vadd.f32 %v675, %v723
  %v725 = vpop.f32.mrf.mxu0
  %v726 = vpop.f32.mrf.mxu0
  %v727 = vadd.f32 %v678, %v726
  %v728 = vpop.f32.mrf.mxu0
  %729 = vdwg.mxu0
  %730 = vmatprep.subr.bf16.mxu0 0
  %731 = vmatpush1.bf16.msra.mxu0 %v543
  %732 = vmatprep.subr.bf16.mxu0 0
  %733 = vmatpush1.bf16.msra.mxu0 %v542
  %734 = vmatprep.subr.bf16.mxu0 0
  %735 = vmatpush1.bf16.msra.mxu0 %v541
  %736 = vmatprep.subr.bf16.mxu0 0
  %737 = vmatpush1.bf16.msra.mxu0 %v540
  %738 = vmatprep.subr.bf16.mxu0 0
  %739 = vmatpush1.bf16.msra.mxu0 %v539
  %740 = vmatprep.subr.bf16.mxu0 0
  %741 = vmatpush1.bf16.msra.mxu0 %v538
  %742 = vmatprep.subr.bf16.mxu0 0
  %743 = vmatpush1.bf16.msra.mxu0 %v537
  %744 = vmatprep.subr.bf16.mxu0 0
  %745 = vmatpush1.bf16.msra.mxu0 %v536
  %746 = vmatprep.subr.bf16.mxu0 0
  %747 = vmatpush2.bf16.msra.mxu0 %v551
  %748 = vmatprep.subr.bf16.mxu0 0
  %749 = vmatpush2.bf16.msra.mxu0 %v550
  %750 = vmatprep.subr.bf16.mxu0 0
  %751 = vmatpush2.bf16.msra.mxu0 %v549
  %752 = vmatprep.subr.bf16.mxu0 0
  %753 = vmatpush2.bf16.msra.mxu0 %v548
  %754 = vmatprep.subr.bf16.mxu0 0
  %755 = vmatpush2.bf16.msra.mxu0 %v547
  %756 = vmatprep.subr.bf16.mxu0 0
  %757 = vmatpush2.bf16.msra.mxu0 %v546
  %758 = vmatprep.subr.bf16.mxu0 0
  %759 = vmatpush2.bf16.msra.mxu0 %v545
  %760 = vmatprep.subr.bf16.mxu0 0
  %761 = vmatpush2.bf16.msra.mxu0 %v544
  %762 = vmatprep.mubr.bf16.mxu0 %v221
  %763 = vmatmul.mubr.bf16.gmra.mxu0 %v220
  %v764 = vpop.f32.mrf.mxu0
  %v765 = vadd.f32 %v716, %v764
  %v766 = vpop.f32.mrf.mxu0
  %v767 = vpop.f32.mrf.mxu0
  %v768 = vadd.f32 %v719, %v767
  %v769 = vpop.f32.mrf.mxu0
  %770 = vmatprep.mubr.bf16.mxu0 %v229
  %771 = vmatmul.mubr.bf16.gmra.mxu0 %v228
  %v772 = vpop.f32.mrf.mxu0
  %v773 = vadd.f32 %v724, %v772
  %v774 = vpop.f32.mrf.mxu0
  %v775 = vpop.f32.mrf.mxu0
  %v776 = vadd.f32 %v727, %v775
  %v777 = vpop.f32.mrf.mxu0
  %778 = vdwg.mxu0
  %779 = vmatprep.subr.bf16.mxu0 0
  %780 = vmatpush1.bf16.msra.mxu0 %v559
  %781 = vmatprep.subr.bf16.mxu0 0
  %782 = vmatpush1.bf16.msra.mxu0 %v558
  %783 = vmatprep.subr.bf16.mxu0 0
  %784 = vmatpush1.bf16.msra.mxu0 %v557
  %785 = vmatprep.subr.bf16.mxu0 0
  %786 = vmatpush1.bf16.msra.mxu0 %v556
  %787 = vmatprep.subr.bf16.mxu0 0
  %788 = vmatpush1.bf16.msra.mxu0 %v555
  %789 = vmatprep.subr.bf16.mxu0 0
  %790 = vmatpush1.bf16.msra.mxu0 %v554
  %791 = vmatprep.subr.bf16.mxu0 0
  %792 = vmatpush1.bf16.msra.mxu0 %v553
  %793 = vmatprep.subr.bf16.mxu0 0
  %794 = vmatpush1.bf16.msra.mxu0 %v552
  %795 = vmatprep.subr.bf16.mxu0 0
  %796 = vmatpush2.bf16.msra.mxu0 %v567
  %797 = vmatprep.subr.bf16.mxu0 0
  %798 = vmatpush2.bf16.msra.mxu0 %v566
  %799 = vmatprep.subr.bf16.mxu0 0
  %800 = vmatpush2.bf16.msra.mxu0 %v565
  %801 = vmatprep.subr.bf16.mxu0 0
  %802 = vmatpush2.bf16.msra.mxu0 %v564
  %803 = vmatprep.subr.bf16.mxu0 0
  %804 = vmatpush2.bf16.msra.mxu0 %v563
  %805 = vmatprep.subr.bf16.mxu0 0
  %806 = vmatpush2.bf16.msra.mxu0 %v562
  %807 = vmatprep.subr.bf16.mxu0 0
  %808 = vmatpush2.bf16.msra.mxu0 %v561
  %809 = vmatprep.subr.bf16.mxu0 0
  %810 = vmatpush2.bf16.msra.mxu0 %v560
  %811 = vmatprep.mubr.bf16.mxu0 %v223
  %812 = vmatmul.mubr.bf16.gmra.mxu0 %v222
  %v813 = vpop.f32.mrf.mxu0
  %v814 = vadd.f32 %v765, %v813
  %v815 = vpop.f32.mrf.mxu0
  %v816 = vpop.f32.mrf.mxu0
  %v817 = vadd.f32 %v768, %v816
  %v818 = vpop.f32.mrf.mxu0
  %819 = vmatprep.mubr.bf16.mxu0 %v231
  %820 = vmatmul.mubr.bf16.gmra.mxu0 %v230
  %v821 = vpop.f32.mrf.mxu0
  %v822 = vadd.f32 %v773, %v821
  %v823 = vpop.f32.mrf.mxu0
  %v824 = vpop.f32.mrf.mxu0
  %v825 = vadd.f32 %v776, %v824
  %v826 = vpop.f32.mrf.mxu0
  %827 = vdwg.mxu0
  %v828 = vadd.f32 %v20, %v814
  %v829 = vadd.f32 %v21, %v817
  %v830 = vadd.f32 %v22, %v822
  %v831 = vadd.f32 %v23, %v825
  %832 = vst [vmem:[#allocation2] sm:$0xff] %v828
  %833 = vst [vmem:[#allocation2 + $0x8] sm:$0xff] %v829
  %834 = vst [vmem:[#allocation2 + $0x10] sm:$0xff] %v830
  %835 = vst [vmem:[#allocation2 + $0x18] sm:$0xff] %v831
  // Predicated region
  $region14: #{discriminator_forward.6} parent=0 // pred_check
    %p836 = pneg %p12
  $region15: #{discriminator_forward.6} parent=0 // pred_check_branch
    %838 = sbr.rel (%p836) target = $region17
  $region16: #{discriminator_forward.6} parent=0 // pred_region
    %v839 = vld [vmem:[#allocation2] sm:$0xff]
    %v840 = vld [vmem:[#allocation2 + $0x8] sm:$0xff]
    %v841 = vld [vmem:[#allocation2 + $0x10] sm:$0xff]
    %v842 = vld [vmem:[#allocation2 + $0x18] sm:$0xff]
    %v843 = vpack.c.bf16 %v840, %v839
    %v844 = vpack.c.bf16 %v842, %v841
    %v847 = vunpack.c.l.b16 %v843
    %v848 = vunpack.c.h.b16 %v843
    %v849 = vunpack.c.l.b16 %v844
    %v850 = vunpack.c.h.b16 %v844
    %v851 = vpack.c.b16 %v847, %v847
    %v852 = vpack.c.b16 %v848, %v848
    %v853 = vpack.c.b16 %v849, %v849
    %v854 = vpack.c.b16 %v850, %v850
    %859 = vst [vmem:[%s2] sm:$0xf] %v851
    %860 = vst [vmem:[%s2 + $0x4] sm:$0xf] %v852
    %861 = vst [vmem:[%s2 + $0x8] sm:$0xf] %v853
    %862 = vst [vmem:[%s2 + $0xc] sm:$0xf] %v854
  $region17: #{discriminator_forward.6} parent=0 // pred_fallthru
    _
  // Predicated region
  $region18: #{discriminator_forward.6} parent=0 // pred_check
    _
  $region19: #{discriminator_forward.6} parent=0 // pred_check_branch
    %864 = sbr.rel (0) target = $region21
  $region20: #{discriminator_forward.6} parent=0 // pred_region
    _
  $region21: #{discriminator_forward.6} parent=0 // pred_fallthru
    _
  // Predicated region
  $region22: #{discriminator_forward.6} parent=0 // pred_check
    _
  $region23: #{discriminator_forward.6} parent=0 // pred_check_branch
    %866 = sbr.rel (0) target = $region25
  $region24: #{discriminator_forward.6} parent=0 // pred_region
    _
  $region25: #{discriminator_forward.6} parent=0 // pred_fallthru
    _

// kernel: discriminator_forward.9
$region0: #{discriminator_forward.9}
  #allocation0 [shape = 'u32[]', space=smem, size = 0x4, offset = 0x4, fixed_abs, tag = 'smem constant byte address 0x4 - core index']
  #allocation1 [shape = 'u32[144,128]{1,0:T(1,128)}', space=vmem, size = 0x12000, scoped, tag = 'internal scratch']
  #allocation2 [shape = 'f32[8,128]{1,0:T(8,128)}', space=vmem, size = 0x1000, scoped, tag = 'scratch operand']
  %s0 = inlined_call_operand.vmem [shape: bf16[8,2048], index: 0, kind: input, shape index: {}]
  %s1 = inlined_call_operand.vmem [shape: bf16[1,2048], index: 1, kind: input, shape index: {}]
  %s2 = inlined_call_operand.vmem [shape: f32[16,128], index: 2, kind: output, shape index: {}]
  %s3 = sld [smem:[#allocation0]]
  $region49: #{discriminator_forward.9} parent=0
    _
  %s5 = ssub.s32 1, %s3
  %s6 = scalar_select 0, %s5, %s3
  loop: start=0, step=1, limit=4
  $region2: #{discriminator_forward.9} parent=0 // loop_pre_header
    _
  $region3: #{discriminator_forward.9} parent=0 // loop_header
    %s8 = sphi 0, %s12
    %p9 = scmp.ge.s32.totalorder %s8, 4
    %s15 = sphi 0, %s27
    %s16 = sphi 0, %s23
    %s17 = sphi 0, %s15
    %s18 = sphi 0, %s16
    %s19 = sphi 0, %s17
    %s20 = sphi 0, %s18
    %s32 = sphi 0, %s34
    %s35 = sphi 0, %s32
    %s36 = sphi 0, %s35
    %s52 = sphi 0, %s36
    %s60 = sphi 0, %s62
    %s63 = sphi 0, %s60
    %s64 = sphi 0, %s63
    %s80 = sphi 0, %s64
    %s86 = sphi 0, %s88
    %s89 = sphi 0, %s86
    %s90 = sphi 0, %s89
    %s106 = sphi 0, %s90
  $region4: #{discriminator_forward.9} parent=0 // loop_header_branch
    %11 = sbr.rel (%p9) target = $region8
  $region5: #{discriminator_forward.9} parent=0 // loop_body
    %s13 = ssub.s32 %s8, 1
    %s14 = ssub.s32 %s8, 2
    %s21 = sadd.s32 1, %s16
    %p22 = scmp.ge.s32.totalorder %s21, 1
    %s23 = scalar_select %p22, 0, %s21
    %s24 = sadd.s32 1, %s15
    %s25 = scalar_select %p22, %s24, %s15
    %p26 = scmp.ge.s32.totalorder %s25, 2
    %s27 = scalar_select %p26, 0, %s25
    %s28 = sadd.s32 %s15, %s16
    %s29 = sadd.s32 %s27, %s23
    %s30 = ssub.s32 %s28, %s29
    %p31 = scmp.eq.s32.totalorder %s30, 0
    %s33 = sadd.s32 %s32, 1
    %s34 = scalar_select %p31, %s32, %s33
    %p37 = pneg %p31
    %p38 = scmp.eq.s32.totalorder %s8, 1
    %p39 = por %p37, %p38
    %p40 = scmp.ne.s32.totalorder %s32, %s35
    %p41 = scmp.eq.s32.totalorder %s8, 0
    %p42 = por %p40, %p41
    %p43 = scmp.ne.s32.totalorder %s32, %s35
    %p44 = scmp.eq.s32.totalorder %s13, 1
    %p45 = por %p43, %p44
    %p46 = scmp.ne.s32.totalorder %s35, %s36
    %p47 = scmp.eq.s32.totalorder %s13, 0
    %p48 = por %p46, %p47
    %p49 = scmp.ne.s32.totalorder %s35, %s36
    %p50 = scmp.eq.s32.totalorder %s14, 1
    %p51 = por %p49, %p50
    %p53 = scmp.ne.s32.totalorder %s36, %s52
    %p54 = scmp.eq.s32.totalorder %s14, 0
    %p55 = por %p53, %p54
    %s56 = sadd.s32 %s15, %s16
    %s57 = sadd.s32 %s27, %s23
    %s58 = ssub.s32 %s56, %s57
    %p59 = scmp.eq.s32.totalorder %s58, 0
    %s61 = sadd.s32 %s60, 1
    %s62 = scalar_select %p59, %s60, %s61
    %p65 = pneg %p59
    %p66 = scmp.eq.s32.totalorder %s8, 1
    %p67 = por %p65, %p66
    %p68 = scmp.ne.s32.totalorder %s60, %s63
    %p69 = scmp.eq.s32.totalorder %s8, 0
    %p70 = por %p68, %p69
    %p71 = scmp.ne.s32.totalorder %s60, %s63
    %p72 = scmp.eq.s32.totalorder %s13, 1
    %p73 = por %p71, %p72
    %p74 = scmp.ne.s32.totalorder %s63, %s64
    %p75 = scmp.eq.s32.totalorder %s13, 0
    %p76 = por %p74, %p75
    %p77 = scmp.ne.s32.totalorder %s63, %s64
    %p78 = scmp.eq.s32.totalorder %s14, 1
    %p79 = por %p77, %p78
    %p81 = scmp.ne.s32.totalorder %s64, %s80
    %p82 = scmp.eq.s32.totalorder %s14, 0
    %p83 = por %p81, %p82
    %s84 = ssub.s32 %s15, %s27
    %p85 = scmp.eq.s32.totalorder %s84, 0
    %s87 = sadd.s32 %s86, 1
    %s88 = scalar_select %p85, %s86, %s87
    %p91 = pneg %p85
    %p92 = scmp.eq.s32.totalorder %s8, 1
    %p93 = por %p91, %p92
    %p94 = scmp.ne.s32.totalorder %s86, %s89
    %p95 = scmp.eq.s32.totalorder %s8, 0
    %p96 = por %p94, %p95
    %p97 = scmp.ne.s32.totalorder %s86, %s89
    %p98 = scmp.eq.s32.totalorder %s13, 1
    %p99 = por %p97, %p98
    %p100 = scmp.ne.s32.totalorder %s89, %s90
    %p101 = scmp.eq.s32.totalorder %s13, 0
    %p102 = por %p100, %p101
    %p103 = scmp.ne.s32.totalorder %s89, %s90
    %p104 = scmp.eq.s32.totalorder %s14, 1
    %p105 = por %p103, %p104
    %p107 = scmp.ne.s32.totalorder %s90, %s106
    %p108 = scmp.eq.s32.totalorder %s14, 0
    %p109 = por %p107, %p108
    %p110 = scmp.le.s32.totalorder 1, %s8
    %p111 = scmp.lt.s32.totalorder %s8, 3
    %p112 = pnand %p110, %p111
    %p113 = pneg %p112
    // Predicated region
    $region9: #{discriminator_forward.9} parent=5 // pred_check
      _
    $region10: #{discriminator_forward.9} parent=5 // pred_check_branch
      %115 = sbr.rel (%p112) target = $region12
    $region11: #{discriminator_forward.9} parent=5 // pred_region
      %s116 = ssub.s32 %s8, 1
    $region12: #{discriminator_forward.9} parent=5 // pred_fallthru
      _
    %p117 = scmp.lt.s32.totalorder %s8, 2
    // Predicated region
    $region13: #{discriminator_forward.9} parent=5 // pred_check
      %p118 = pneg %p117
    $region14: #{discriminator_forward.9} parent=5 // pred_check_branch
      %120 = sbr.rel (%p118) target = $region16
    $region15: #{discriminator_forward.9} parent=5 // pred_region
      // Predicated region
      $region17: #{discriminator_forward.9} parent=15 // pred_check
        %p121 = pneg %p42
      $region18: #{discriminator_forward.9} parent=15 // pred_check_branch
        %123 = sbr.rel (%p121) target = $region20
      $region19: #{discriminator_forward.9} parent=15 // pred_region
        %s124 = sadd.s32 %s15, %s16
        %s125 = smul.u32 8, %s124
        %p126 = scmp.lt.s32.totalorder %s125, 15
        %s127 = scalar_select %p126, %s125, 15
        %s128 = smul.addr %s127, 4
        %s129 = scalar_lea.vmem %s0, %s128
        %s130 = sadd.s32 %s15, %s16
        %s131 = smul.u32 8, %s130
      $region20: #{discriminator_forward.9} parent=15 // pred_fallthru
        _
      // Predicated region
      $region21: #{discriminator_forward.9} parent=15 // pred_check
        %p132 = pneg %p70
      $region22: #{discriminator_forward.9} parent=15 // pred_check_branch
        %134 = sbr.rel (%p132) target = $region24
      $region23: #{discriminator_forward.9} parent=15 // pred_region
        %s135 = sadd.s32 %s15, %s16
        %s136 = smul.u32 8, %s135
        %p137 = scmp.lt.s32.totalorder %s136, 15
        %s138 = scalar_select %p137, %s136, 15
        %s139 = scalar_lea.vmem %s1, %s138
        %s140 = sadd.s32 %s15, %s16
        %s141 = smul.u32 8, %s140
      $region24: #{discriminator_forward.9} parent=15 // pred_fallthru
        _
    $region16: #{discriminator_forward.9} parent=5 // pred_fallthru
      _
    %p142 = scmp.le.s32.totalorder 1, %s8
    %p143 = scmp.lt.s32.totalorder %s8, 3
    %p144 = pnand %p142, %p143
    %p145 = pneg %p144
    // Predicated region
    $region25: #{discriminator_forward.9} parent=5 // pred_check
      _
    $region26: #{discriminator_forward.9} parent=5 // pred_check_branch
      %147 = sbr.rel (%p144) target = $region28
    $region27: #{discriminator_forward.9} parent=5 // pred_region
      %s148 = ssub.s32 %s8, 1
      %s149 = sadd.s32 %s17, %s18
      %s150 = smul.u32 8, %s149
      %p151 = scmp.lt.s32.totalorder %s150, 15
      %s152 = scalar_select %p151, %s150, 15
      %s153 = smul.addr %s152, 4
      %s154 = scalar_lea.vmem %s0, %s153
      %p155 = pneg %p48
      %p156 = pneg %p45
      %s157 = sadd.s32 %s17, %s18
      %s158 = smul.u32 8, %s157
      %p159 = scmp.lt.s32.totalorder %s158, 15
      %s160 = scalar_select %p159, %s158, 15
      %s161 = scalar_lea.vmem %s1, %s160
      %p162 = pneg %p76
      %p163 = pneg %p73
      %p164 = pneg %p102
      %p165 = pneg %p99
      %p166 = scmp.lt.s32.totalorder %s17, 1
      %s167 = scalar_select %p166, %s17, 1
      %s168 = smul.addr %s167, 8
      %s169 = scalar_lea.vmem %s2, %s168
      %s170 = sadd.s32 %s17, %s18
      %s171 = smul.u32 8, %s170
      %p172 = scmp.lt.s32.totalorder %s171, 15
      %s173 = scalar_select %p172, %s171, 15
      %s174 = smul.addr %s173, 4
      %s175 = scalar_lea.vmem %s0, %s174
      %s176 = sadd.s32 %s17, %s18
      %s177 = smul.u32 8, %s176
      %s178 = sadd.s32 %s17, %s18
      %s179 = smul.u32 8, %s178
      %p180 = scmp.lt.s32.totalorder %s179, 15
      %s181 = scalar_select %p180, %s179, 15
      %s182 = scalar_lea.vmem %s1, %s181
      %s183 = sadd.s32 %s17, %s18
      %s184 = smul.u32 8, %s183
      %p185 = scmp.lt.s32.totalorder %s17, 1
      %s186 = scalar_select %p185, %s17, 1
      %s187 = smul.addr %s186, 8
      %s188 = scalar_lea.vmem %s2, %s187
      %p189 = scmp.eq.s32.totalorder %s18, 0
      // Predicated region
      $region29: #{discriminator_forward.9} parent=27 // pred_check
        %p190 = pneg %p189
      $region30: #{discriminator_forward.9} parent=27 // pred_check_branch
        %192 = sbr.rel (%p190) target = $region32
      $region31: #{discriminator_forward.9} parent=27 // pred_region
        %193 = vst [vmem:[#allocation2] sm:$0xff] 0.0
      $region32: #{discriminator_forward.9} parent=27 // pred_fallthru
        _
      %v194 = vld [vmem:[%s175] sm:$0xff]
      %v195 = vld [vmem:[%s175 + $0x8] sm:$0xff]
      %v196 = vld [vmem:[%s175 + $0x10] sm:$0xff]
      %v197 = vld [vmem:[%s175 + $0x18] sm:$0xff]
      %v198 = vunpack.c.l.bf16 %v194
      %v199 = vunpack.c.h.bf16 %v194
      %v200 = vunpack.c.l.bf16 %v195
      %v201 = vunpack.c.h.bf16 %v195
      %v202 = vunpack.c.l.bf16 %v196
      %v203 = vunpack.c.h.bf16 %v196
      %v204 = vunpack.c.l.bf16 %v197
      %v205 = vunpack.c.h.bf16 %v197
      %v206 = vld [vmem:[%s182] sm:$0xff]
      %v207 = vunpack.c.l.bf16 %v206
      %v208 = vunpack.c.h.bf16 %v206
      %v209 = vld [vmem:[#allocation2] sm:$0xff]
      %v212 = vlaneseq
      %v213 = vshrl.u32 %v212, 7
      %v214 = vsub.s32 0, %v213
      %v215 = vrot.slane %v207, %v214
      %v216 = vlaneseq
      %v217 = vshrl.u32 %v216, 7
      %v218 = vsub.s32 2, %v217
      %v219 = vrot.slane %v207, %v218
      %v220 = vlaneseq
      %v221 = vshrl.u32 %v220, 7
      %v222 = vsub.s32 4, %v221
      %v223 = vrot.slane %v207, %v222
      %v224 = vlaneseq
      %v225 = vshrl.u32 %v224, 7
      %v226 = vsub.s32 6, %v225
      %v227 = vrot.slane %v207, %v226
      %v228 = vlaneseq
      %v229 = vshrl.u32 %v228, 7
      %v230 = vsub.s32 0, %v229
      %v231 = vrot.slane %v208, %v230
      %v232 = vlaneseq
      %v233 = vshrl.u32 %v232, 7
      %v234 = vsub.s32 2, %v233
      %v235 = vrot.slane %v208, %v234
      %v236 = vlaneseq
      %v237 = vshrl.u32 %v236, 7
      %v238 = vsub.s32 4, %v237
      %v239 = vrot.slane %v208, %v238
      %v240 = vlaneseq
      %v241 = vshrl.u32 %v240, 7
      %v242 = vsub.s32 6, %v241
      %v243 = vrot.slane %v208, %v242
      %v252 = vlaneseq
      %v253 = vshrl.u32 %v252, 7
      %v254 = vsub.s32 0, %v253
      %v255 = vrot.slane %v215, %v254
      %v256 = vlaneseq
      %v257 = vshrl.u32 %v256, 7
      %v258 = vsub.s32 0, %v257
      %v259 = vrot.slane %v219, %v258
      %v260 = vlaneseq
      %v261 = vshrl.u32 %v260, 7
      %v262 = vsub.s32 0, %v261
      %v263 = vrot.slane %v223, %v262
      %v264 = vlaneseq
      %v265 = vshrl.u32 %v264, 7
      %v266 = vsub.s32 0, %v265
      %v267 = vrot.slane %v227, %v266
      %v268 = vlaneseq
      %v269 = vshrl.u32 %v268, 7
      %v270 = vsub.s32 0, %v269
      %v271 = vrot.slane %v231, %v270
      %v272 = vlaneseq
      %v273 = vshrl.u32 %v272, 7
      %v274 = vsub.s32 0, %v273
      %v275 = vrot.slane %v235, %v274
      %v276 = vlaneseq
      %v277 = vshrl.u32 %v276, 7
      %v278 = vsub.s32 0, %v277
      %v279 = vrot.slane %v239, %v278
      %v280 = vlaneseq
      %v281 = vshrl.u32 %v280, 7
      %v282 = vsub.s32 0, %v281
      %v283 = vrot.slane %v243, %v282
      %v284 = vmul.f32 %v198, %v255
      %v285 = vmul.f32 %v199, %v259
      %v286 = vmul.f32 %v200, %v263
      %v287 = vmul.f32 %v201, %v267
      %v288 = vmul.f32 %v202, %v271
      %v289 = vmul.f32 %v203, %v275
      %v290 = vmul.f32 %v204, %v279
      %v291 = vmul.f32 %v205, %v283
      %v292 = vadd.f32 %v284, %v285
      %v293 = vadd.f32 %v292, %v286
      %v294 = vadd.f32 %v293, %v287
      %v295 = vadd.f32 %v294, %v288
      %v296 = vadd.f32 %v295, %v289
      %v297 = vadd.f32 %v296, %v290
      %v298 = vadd.f32 %v297, %v291
      %299 = vadd.xlane.f32.xlu0 %v298
      %v300 = vpop.xlane.xlu0 %299
      %v301 = vadd.f32 %v209, %v300
      %302 = vst [vmem:[#allocation2] sm:$0xff] %v301
      // Predicated region
      $region33: #{discriminator_forward.9} parent=27 // pred_check
        %p303 = pneg %p189
      $region34: #{discriminator_forward.9} parent=27 // pred_check_branch
        %305 = sbr.rel (%p303) target = $region36
      $region35: #{discriminator_forward.9} parent=27 // pred_region
        %v306 = vld [vmem:[#allocation2] sm:$0xff]
        %307 = vst [vmem:[%s188] sm:$0xff] %v306
      $region36: #{discriminator_forward.9} parent=27 // pred_fallthru
        _
      %p308 = scmp.lt.s32.totalorder %s17, 1
      %s309 = scalar_select %p308, %s17, 1
      %s310 = smul.addr %s309, 8
      %s311 = scalar_lea.vmem %s2, %s310
      // Predicated region
      $region37: #{discriminator_forward.9} parent=27 // pred_check
        %p312 = pneg %p99
      $region38: #{discriminator_forward.9} parent=27 // pred_check_branch
        %314 = sbr.rel (%p312) target = $region40
      $region39: #{discriminator_forward.9} parent=27 // pred_region
        _
      $region40: #{discriminator_forward.9} parent=27 // pred_fallthru
        _
    $region28: #{discriminator_forward.9} parent=5 // pred_fallthru
      _
    %p315 = scmp.le.s32.totalorder 2, %s8
    // Predicated region
    $region41: #{discriminator_forward.9} parent=5 // pred_check
      %p316 = pneg %p315
    $region42: #{discriminator_forward.9} parent=5 // pred_check_branch
      %318 = sbr.rel (%p316) target = $region44
    $region43: #{discriminator_forward.9} parent=5 // pred_region
      %s319 = ssub.s32 %s8, 2
      // Predicated region
      $region45: #{discriminator_forward.9} parent=43 // pred_check
        %p320 = pneg %p105
      $region46: #{discriminator_forward.9} parent=43 // pred_check_branch
        %322 = sbr.rel (%p320) target = $region48
      $region47: #{discriminator_forward.9} parent=43 // pred_region
        %p323 = scmp.lt.s32.totalorder %s19, 1
        %s324 = scalar_select %p323, %s19, 1
        %s325 = smul.addr %s324, 8
        %s326 = scalar_lea.vmem %s2, %s325
      $region48: #{discriminator_forward.9} parent=43 // pred_fallthru
        _
    $region44: #{discriminator_forward.9} parent=5 // pred_fallthru
      _
  $region6: #{discriminator_forward.9} parent=0 // loop_footer
    %s12 = sadd.s32 1, %s8
  $region7: #{discriminator_forward.9} parent=0 // loop_footer_branch
    %7 = sbr.rel target = $region3
  $region8: #{discriminator_forward.9} parent=0 // loop_exit
    _

</llo_original>
